<compile_context>
chip_gen: v7x
topology: tpu7x:2x2x1
jax: 0.10.0
libtpu: 0.0.40
codegen_flags: <defaults>
</compile_context>

<pallas_src>
import functools
import math

import jax
import jax.numpy as jnp
from jax.experimental import pallas as pl
from jax.experimental.pallas import tpu as pltpu


# Keep the no-grid (everything resident in VMEM) path under this budget so it
# fits the default scoped VMEM limit on every generation (v5e 16 MiB scoped,
# v6e 32 MiB, v7x 32 MiB scoped / 64 MiB physical).
_VMEM_NOGRID_BUDGET_BYTES = 12 * 1024 * 1024
_DEFAULT_TILE_N = 512  # rows per grid step when the tiled path is needed


# ----------------------------------------------------------------------------
# Pallas kernel: internal full-hypernet MLP over (a tile of) chunk rows.
#
#   a1  = relu(c @ W1_ce + b1_eff)      with b1_eff = task_emb @ W1_te + b1
#   a2  = relu(a1 @ W2 + b2)
#   out = a2 @ W3 + b3
#
# b1_eff is per-forward constant (identical for every chunk) and is computed
# once in the jitted wrapper, not per grid step.
# ----------------------------------------------------------------------------
def _chunked_hnet_kernel(ce_ref, w1_ref, b1_ref, w2_ref, b2_ref,
                         w3_ref, b3_ref, out_ref):
    dot = functools.partial(jnp.dot, preferred_element_type=jnp.float32,
                            precision=jax.lax.Precision.HIGHEST)
    a1 = jnp.maximum(dot(ce_ref[...], w1_ref[...]) + b1_ref[...], 0.0)  # ReLU
    a2 = jnp.maximum(dot(a1, w2_ref[...]) + b2_ref[...], 0.0)          # ReLU
    out_ref[...] = dot(a2, w3_ref[...]) + b3_ref[...]


# ----------------------------------------------------------------------------
# One-time parameter preprocessing (outside the hot path).
# ----------------------------------------------------------------------------
def prepare_hnet_params(theta, te_dim):
    """theta = [chunk_embs, W1, b1, W2, b2, W3, b3] (cf. module's self.theta).

    Pre-transposes weights to [in, out] (feature axis -> TPU lanes), casts to
    f32, reshapes biases to (1, out) and splits W1 into its task-embedding /
    chunk-embedding halves. Call once; reuse the returned dict per forward.
    """
    chunk_embs, w1, b1, w2, b2, w3, b3 = theta
    f32 = lambda a: jnp.asarray(a, jnp.float32)
    w1 = f32(w1)                                    # (l1, te_dim + ce_dim)
    return {
        "chunk_embs": f32(chunk_embs),              # (num_chunks, ce_dim)
        "w1_te": w1[:, :te_dim].T,                  # (te_dim, l1)
        "w1_ce": w1[:, te_dim:].T,                  # (ce_dim, l1)
        "b1": f32(b1)[None, :],                     # (1, l1)
        "w2": f32(w2).T,                            # (l1, l2)
        "b2": f32(b2)[None, :],                     # (1, l2)
        "w3": f32(w3).T,                            # (l2, chunk_dim)
        "b3": f32(b3)[None, :],                     # (1, chunk_dim)
    }


# ----------------------------------------------------------------------------
# Pallas wrapper: run the hypernet MLP on all chunks.
# ----------------------------------------------------------------------------
def hypernet_mlp_pallas(params, task_emb, *, tile_n="auto"):
    """Returns (num_chunks, chunk_dim) f32.

    tile_n="auto": pick no-grid whole-array VMEM path for small/medium sizes,
                   otherwise a 1-D "parallel" grid with 512-row tiles.
    tile_n=None  : force the single-invocation whole-array VMEM path.
    tile_n=int   : force the tiled path with that tile (rounded to mult. of 8).
    """
    ce = params["chunk_embs"]
    num_chunks, ce_dim = ce.shape
    chunk_dim = params["w3"].shape[1]

    te_row = jnp.asarray(task_emb, jnp.float32).reshape(1, -1)
    # Per-forward constant: fold the task-embedding contribution into the
    # first-layer bias (replaces the reference's broadcast_to + concatenate).
    b1_eff = jnp.dot(te_row, params["w1_te"],
                     preferred_element_type=jnp.float32,
                     precision=jax.lax.Precision.HIGHEST) + params["b1"]

    args = (ce, params["w1_ce"], b1_eff, params["w2"], params["b2"],
            params["w3"], params["b3"])

    # Static VMEM footprint estimate for the no-grid path (no pipelining, so
    # roughly inputs + output, no double buffers).
    weight_bytes = sum(int(math.prod(a.shape)) * 4 for a in args[1:])
    nogrid_bytes = (num_chunks * (ce_dim + chunk_dim)) * 4 + weight_bytes

    if tile_n == "auto":
        tile_n = None if nogrid_bytes <= _VMEM_NOGRID_BUDGET_BYTES \
            else _DEFAULT_TILE_N

    vmem = pltpu.MemorySpace.VMEM
    out_shape = jax.ShapeDtypeStruct((num_chunks, chunk_dim), jnp.float32)

    if tile_n is None:
        # Single invocation, everything resident in VMEM; no grid / pipeline
        # machinery. Latency floor for typical chunk counts.
        return pl.pallas_call(
            _chunked_hnet_kernel,
            out_shape=out_shape,
            in_specs=[pl.BlockSpec(memory_space=vmem) for _ in args],
            out_specs=pl.BlockSpec(memory_space=vmem),
        )(*args)

    # --- Tiled path for large chunk counts ----------------------------------
    # chunk_embs streams through a 1-D "parallel" grid (shards across both
    # TensorCores on v7x); the small weights/biases stay untiled in VMEM.
    # No explicit pad/slice: Pallas masks the ragged last block's writeback.
    tile_n = max(8, (int(tile_n) // 8) * 8)
    grid = (pl.cdiv(num_chunks, tile_n),)
    return pl.pallas_call(
        _chunked_hnet_kernel,
        out_shape=out_shape,
        grid=grid,
        in_specs=[pl.BlockSpec((tile_n, ce_dim), lambda i: (i, 0))]
                 + [pl.BlockSpec(memory_space=vmem) for _ in args[1:]],
        out_specs=pl.BlockSpec((tile_n, chunk_dim), lambda i: (i, 0)),
        compiler_params=pltpu.CompilerParams(
            dimension_semantics=("parallel",)),
    )(*args)


# ----------------------------------------------------------------------------
# Jitted forward reproducing ChunkedHyperNetworkHandler.forward
# ----------------------------------------------------------------------------
@functools.partial(jax.jit,
                   static_argnames=("target_shapes", "chunk_dim", "tile_n"))
def chunked_hypernet_forward(params, task_emb, *, target_shapes, chunk_dim,
                             tile_n="auto"):
    num_chunks = params["chunk_embs"].shape[0]
    num_outputs = sum(int(math.prod(s)) for s in target_shapes)
    assert num_chunks * chunk_dim >= num_outputs, \
        "target_shapes need more weights than the hypernet produces"
    assert params["w3"].shape[1] == chunk_dim

    out = hypernet_mlp_pallas(params, task_emb, tile_n=tile_n)
    # weights[0].view(1, -1) then slice into target shapes.
    flat = out.reshape(-1)
    ret, ind = [], 0
    for s in target_shapes:
        n = int(math.prod(s))
        ret.append(flat[ind:ind + n].reshape(s))
        ind += n
    # TODO(synk): dTheta / noise_dim / ext_inputs / _shifts paths use the
    # reference defaults (disabled) and are not implemented here.
    return ret


# Pure-jnp reference of the module forward (literal broadcast+concat MLP),
# f32 matmuls (precision=HIGHEST) to mirror the float32 PyTorch reference.
def _reference_forward(theta, task_emb, target_shapes):
    chunk_embs, w1, b1, w2, b2, w3, b3 = [jnp.asarray(a, jnp.float32)
                                          for a in theta]
    hp = jax.lax.Precision.HIGHEST
    num_chunks = chunk_embs.shape[0]
    te = jnp.broadcast_to(task_emb[None, :], (num_chunks, task_emb.shape[0]))
    h = jnp.concatenate([te, chunk_embs], axis=1)
    a1 = jax.nn.relu(jnp.dot(h, w1.T, precision=hp) + b1)
    a2 = jax.nn.relu(jnp.dot(a1, w2.T, precision=hp) + b2)
    out = jnp.dot(a2, w3.T, precision=hp) + b3
    flat = out.reshape(-1)
    ret, ind = [], 0
    for s in target_shapes:
        n = int(math.prod(s))
        ret.append(flat[ind:ind + n].reshape(s))
        ind += n
    return ret


if __name__ == "__main__":
    def build_problem(key, target_shapes, chunk_dim, ce_dim, te_dim, layers):
        num_outputs = sum(int(math.prod(s)) for s in target_shapes)
        num_chunks = int(math.ceil(num_outputs / chunk_dim))
        in_dim = te_dim + ce_dim
        ks = jax.random.split(key, 5)

        def linear_init(kk, out_f, in_f):
            kw, kb = jax.random.split(kk)
            bound = 1.0 / math.sqrt(in_f)
            w = jax.random.uniform(kw, (out_f, in_f), jnp.float32, -bound, bound)
            b = jax.random.uniform(kb, (out_f,), jnp.float32, -bound, bound)
            return w, b

        # Chunk embeddings ~ N(0,1) (nn.init.normal_); task emb from add_task.
        chunk_embs = jax.random.normal(ks[0], (num_chunks, ce_dim), jnp.float32)
        task_emb = jax.random.normal(ks[1], (te_dim,), jnp.float32)
        w1, b1 = linear_init(ks[2], layers[0], in_dim)
        w2, b2 = linear_init(ks[3], layers[1], layers[0])
        w3, b3 = linear_init(ks[4], chunk_dim, layers[1])
        return [chunk_embs, w1, b1, w2, b2, w3, b3], task_emb

    def check(outs, refs, shapes, tol):
        for o, r, s in zip(outs, refs, shapes):
            assert o.shape == tuple(s), (o.shape, s)
            err = float(jnp.max(jnp.abs(o - r)))
            assert jnp.allclose(o, r, rtol=tol, atol=tol), err

    key = jax.random.PRNGKey(0)
    k1, k2 = jax.random.split(key)
    chunk_dim, ce_dim, te_dim, layers = 128, 8, 8, (32, 64)

    # --- Config 1: small (4 chunks) -> auto picks the no-grid VMEM path -----
    ts1 = ((16, 16), (16,), (8, 16), (8,))
    theta1, temb1 = build_problem(k1, ts1, chunk_dim, ce_dim, te_dim, layers)
    params1 = prepare_hnet_params(theta1, te_dim)          # once, off hot path
    outs1 = chunked_hypernet_forward(params1, temb1, target_shapes=ts1,
                                     chunk_dim=chunk_dim)
    outs1 = [jax.block_until_ready(o) for o in outs1]
    check(outs1, _reference_forward(theta1, temb1, ts1), ts1, 1e-4)

    # --- Config 2: 516 chunks, auto path (still no-grid: ~280 KB resident) --
    ts2 = ((512, 128), (512,))
    theta2, temb2 = build_problem(k2, ts2, chunk_dim, ce_dim, te_dim, layers)
    params2 = prepare_hnet_params(theta2, te_dim)
    outs2 = chunked_hypernet_forward(params2, temb2, target_shapes=ts2,
                                     chunk_dim=chunk_dim)
    outs2 = [jax.block_until_ready(o) for o in outs2]
    refs2 = _reference_forward(theta2, temb2, ts2)
    check(outs2, refs2, ts2, 1e-4)

    # --- Config 2b: same data, forced tiled path (2 steps, ragged last block
    #     of 4 rows -> exercises Pallas's masked ragged writeback) -----------
    outs2b = chunked_hypernet_forward(params2, temb2, target_shapes=ts2,
                                      chunk_dim=chunk_dim, tile_n=512)
    outs2b = [jax.block_until_ready(o) for o in outs2b]
    check(outs2b, refs2, ts2, 1e-4)

    print("KERNEL_OK")
</pallas_src>

<mosaic_0001>
module attributes {stable_mosaic.version = 11 : i64} {
  func.func @_chunked_hnet_kernel(%arg0: memref<4x8xf32, #tpu.memory_space<vmem>>, %arg1: memref<8x32xf32, #tpu.memory_space<vmem>>, %arg2: memref<1x32xf32, #tpu.memory_space<vmem>>, %arg3: memref<32x64xf32, #tpu.memory_space<vmem>>, %arg4: memref<1x64xf32, #tpu.memory_space<vmem>>, %arg5: memref<64x128xf32, #tpu.memory_space<vmem>>, %arg6: memref<1x128xf32, #tpu.memory_space<vmem>>, %arg7: memref<4x128xf32, #tpu.memory_space<vmem>>) attributes {dimension_semantics = [], scalar_prefetch = 0 : i64, scratch_operands = 0 : i64, tpu.core_type = #tpu.core_type<tc>} {
    %c0 = arith.constant 0 : index
    %c0_0 = arith.constant 0 : index
    %0 = vector.load %arg0[%c0, %c0_0] : memref<4x8xf32, #tpu.memory_space<vmem>>, vector<4x8xf32>
    %c0_1 = arith.constant 0 : index
    %c0_2 = arith.constant 0 : index
    %1 = vector.load %arg1[%c0_1, %c0_2] : memref<8x32xf32, #tpu.memory_space<vmem>>, vector<8x32xf32>
    %cst = arith.constant dense<0.000000e+00> : vector<4x32xf32>
    %2 = tpu.matmul %0, %1, %cst {dimension_numbers = #tpu.dot_dimension_numbers<[1], [0], [0], [1], [0, 0, 1, 1], [], []>, precision = #tpu.contract_precision<fp32>} : vector<4x8xf32>, vector<8x32xf32>, vector<4x32xf32> -> vector<4x32xf32>
    %c0_3 = arith.constant 0 : index
    %c0_4 = arith.constant 0 : index
    %3 = vector.load %arg2[%c0_3, %c0_4] : memref<1x32xf32, #tpu.memory_space<vmem>>, vector<1x32xf32>
    %4 = vector.broadcast %3 : vector<1x32xf32> to vector<4x32xf32>
    %5 = arith.addf %2, %4 : vector<4x32xf32>
    %cst_5 = arith.constant 0.000000e+00 : f32
    %6 = vector.broadcast %cst_5 : f32 to vector<4x32xf32>
    %7 = arith.maximumf %5, %6 : vector<4x32xf32>
    %c0_6 = arith.constant 0 : index
    %c0_7 = arith.constant 0 : index
    %8 = vector.load %arg3[%c0_6, %c0_7] : memref<32x64xf32, #tpu.memory_space<vmem>>, vector<32x64xf32>
    %cst_8 = arith.constant dense<0.000000e+00> : vector<4x64xf32>
    %9 = tpu.matmul %7, %8, %cst_8 {dimension_numbers = #tpu.dot_dimension_numbers<[1], [0], [0], [1], [0, 0, 1, 1], [], []>, precision = #tpu.contract_precision<fp32>} : vector<4x32xf32>, vector<32x64xf32>, vector<4x64xf32> -> vector<4x64xf32>
    %c0_9 = arith.constant 0 : index
    %c0_10 = arith.constant 0 : index
    %10 = vector.load %arg4[%c0_9, %c0_10] : memref<1x64xf32, #tpu.memory_space<vmem>>, vector<1x64xf32>
    %11 = vector.broadcast %10 : vector<1x64xf32> to vector<4x64xf32>
    %12 = arith.addf %9, %11 : vector<4x64xf32>
    %cst_11 = arith.constant 0.000000e+00 : f32
    %13 = vector.broadcast %cst_11 : f32 to vector<4x64xf32>
    %14 = arith.maximumf %12, %13 : vector<4x64xf32>
    %c0_12 = arith.constant 0 : index
    %c0_13 = arith.constant 0 : index
    %15 = vector.load %arg5[%c0_12, %c0_13] : memref<64x128xf32, #tpu.memory_space<vmem>>, vector<64x128xf32>
    %cst_14 = arith.constant dense<0.000000e+00> : vector<4x128xf32>
    %16 = tpu.matmul %14, %15, %cst_14 {dimension_numbers = #tpu.dot_dimension_numbers<[1], [0], [0], [1], [0, 0, 1, 1], [], []>, precision = #tpu.contract_precision<fp32>} : vector<4x64xf32>, vector<64x128xf32>, vector<4x128xf32> -> vector<4x128xf32>
    %c0_15 = arith.constant 0 : index
    %c0_16 = arith.constant 0 : index
    %17 = vector.load %arg6[%c0_15, %c0_16] : memref<1x128xf32, #tpu.memory_space<vmem>>, vector<1x128xf32>
    %18 = vector.broadcast %17 : vector<1x128xf32> to vector<4x128xf32>
    %19 = arith.addf %16, %18 : vector<4x128xf32>
    %c0_17 = arith.constant 0 : index
    %c0_18 = arith.constant 0 : index
    %20 = vector.load %arg7[%c0_17, %c0_18] : memref<4x128xf32, #tpu.memory_space<vmem>>, vector<4x128xf32>
    tpu.vector_store %arg7[%c0_17, %c0_18], %19 {strides = array<i32>} : memref<4x128xf32, #tpu.memory_space<vmem>>, vector<4x128xf32>,
    return
  }
}

</mosaic_0001>

<llo_original>
// kernel: chunked_hypernet_forward.1
$region0: #{chunked_hypernet_forward.1}
  #allocation0 [shape = 'u32[]', space=smem, size = 0x4, offset = 0x4, fixed_abs, tag = 'smem constant byte address 0x4 - core index']
  #allocation1 [shape = 'u32[144,128]{1,0:T(1,128)}', space=vmem, size = 0x12000, scoped, tag = 'internal scratch']
  %s0 = inlined_call_operand.vmem [shape: f32[4,8], index: 0, kind: input, shape index: {}]
  %s1 = inlined_call_operand.vmem [shape: f32[8,32], index: 1, kind: input, shape index: {}]
  %s2 = inlined_call_operand.vmem [shape: f32[1,32], index: 2, kind: input, shape index: {}]
  %s3 = inlined_call_operand.hbm [shape: f32[32,64], index: 3, kind: input, shape index: {}]
  %s4 = inlined_call_operand.vmem [shape: f32[1,64], index: 4, kind: input, shape index: {}]
  %s5 = inlined_call_operand.hbm [shape: f32[64,128], index: 5, kind: input, shape index: {}]
  %s6 = inlined_call_operand.vmem [shape: f32[1,128], index: 6, kind: input, shape index: {}]
  %s7 = inlined_call_operand.vmem [shape: f32[4,128], index: 7, kind: output, shape index: {}]
  %s8 = sld [smem:[#allocation0]]
  $region46: #{chunked_hypernet_forward.1} parent=0
    _
  %s10 = ssub.s32 1, %s8
  %s11 = scalar_select 0, %s10, %s8
  $region1: #{chunked_hypernet_forward.1} parent=0
    #allocation2 [shape = 'u8[16384]{0}', space=vmem, size = 0x4000, scoped, tag = 'input window, operand 3, single buffered']
    #allocation3 [shape = 's32[1]{0}', space=sflag, size = 0x4, scoped, tag = 'scoped memory for chunked_hypernet_forward.1']
    #allocation4 [shape = 'u8[32768]{0}', space=vmem, size = 0x8000, scoped, tag = 'input window, operand 5, single buffered']
    #allocation5 [shape = 's32[1]{0}', space=sflag, size = 0x4, scoped, tag = 'scoped memory for chunked_hypernet_forward.1']
    %12 = vsyncpa [#allocation3], 0
    %13 = vsyncpa [#allocation5], 0
    // Predicated region
    $region2: #{chunked_hypernet_forward.1} parent=1 // pred_check
      _
    $region3: #{chunked_hypernet_forward.1} parent=1 // pred_check_branch
      %15 = sbr.rel (0) target = $region5
    $region4: #{chunked_hypernet_forward.1} parent=1 // pred_region
      _
    $region5: #{chunked_hypernet_forward.1} parent=1 // pred_fallthru
      _
    // Predicated region
    $region6: #{chunked_hypernet_forward.1} parent=1 // pred_check
      _
    $region7: #{chunked_hypernet_forward.1} parent=1 // pred_check_branch
      %17 = sbr.rel (0) target = $region9
    $region8: #{chunked_hypernet_forward.1} parent=1 // pred_region
      _
    $region9: #{chunked_hypernet_forward.1} parent=1 // pred_fallthru
      _
    // Predicated region
    $region10: #{chunked_hypernet_forward.1} parent=1 // pred_check
      _
    $region11: #{chunked_hypernet_forward.1} parent=1 // pred_check_branch
      %19 = sbr.rel (0) target = $region13
    $region12: #{chunked_hypernet_forward.1} parent=1 // pred_region
      _
    $region13: #{chunked_hypernet_forward.1} parent=1 // pred_fallthru
      _
    // Predicated region
    $region14: #{chunked_hypernet_forward.1} parent=1 // pred_check
      _
    $region15: #{chunked_hypernet_forward.1} parent=1 // pred_check_branch
      %21 = sbr.rel (0) target = $region17
    $region16: #{chunked_hypernet_forward.1} parent=1 // pred_region
      %s23 = ssub.s32 512, 512
      %24 = vsyncadd [#allocation3], %s23
      %s25 = sshll.u32 [#allocation2], 4
      %s26 = int_to_ptr.vmem [resolvable:$true] %s25
      %31 = dma.hbm_to_vmem [thread:$0]  %s3, 512, %s26, [#allocation3], 128, 128, 8
    $region17: #{chunked_hypernet_forward.1} parent=1 // pred_fallthru
      _
    // Predicated region
    $region18: #{chunked_hypernet_forward.1} parent=1 // pred_check
      _
    $region19: #{chunked_hypernet_forward.1} parent=1 // pred_check_branch
      %33 = sbr.rel (0) target = $region21
    $region20: #{chunked_hypernet_forward.1} parent=1 // pred_region
      _
    $region21: #{chunked_hypernet_forward.1} parent=1 // pred_fallthru
      _
    // Predicated region
    $region22: #{chunked_hypernet_forward.1} parent=1 // pred_check
      _
    $region23: #{chunked_hypernet_forward.1} parent=1 // pred_check_branch
      %35 = sbr.rel (0) target = $region25
    $region24: #{chunked_hypernet_forward.1} parent=1 // pred_region
      %s37 = ssub.s32 1024, 1024
      %38 = vsyncadd [#allocation5], %s37
      %s39 = sshll.u32 [#allocation4], 4
      %s40 = int_to_ptr.vmem [resolvable:$true] %s39
      %45 = dma.hbm_to_vmem [thread:$0]  %s5, 1024, %s40, [#allocation5], 128, 128, 8
    $region25: #{chunked_hypernet_forward.1} parent=1 // pred_fallthru
      _
    // Predicated region
    $region26: #{chunked_hypernet_forward.1} parent=1 // pred_check
      _
    $region27: #{chunked_hypernet_forward.1} parent=1 // pred_check_branch
      %47 = sbr.rel (0) target = $region29
    $region28: #{chunked_hypernet_forward.1} parent=1 // pred_region
      _
    $region29: #{chunked_hypernet_forward.1} parent=1 // pred_fallthru
      _
    // Predicated region
    $region30: #{chunked_hypernet_forward.1} parent=1 // pred_check
      _
    $region31: #{chunked_hypernet_forward.1} parent=1 // pred_check_branch
      %49 = sbr.rel (0) target = $region33
    $region32: #{chunked_hypernet_forward.1} parent=1 // pred_region
      %50 = dma.done [#allocation3], 512
    $region33: #{chunked_hypernet_forward.1} parent=1 // pred_fallthru
      _
    // Predicated region
    $region34: #{chunked_hypernet_forward.1} parent=1 // pred_check
      _
    $region35: #{chunked_hypernet_forward.1} parent=1 // pred_check_branch
      %52 = sbr.rel (0) target = $region37
    $region36: #{chunked_hypernet_forward.1} parent=1 // pred_region
      %53 = dma.done [#allocation5], 1024
    $region37: #{chunked_hypernet_forward.1} parent=1 // pred_fallthru
      _
    %v54 = vld [vmem:[%s0] sm:$0xf]
    %v55 = vld [vmem:[%s1] sm:$0xff]
    %v56 = vld [vmem:[%s2] sm:$0x1]
    %v58 = vlaneseq
    %v59 = vshrl.u32 %v58, 7
    %v60 = vsub.s32 0, %v59
    %v61 = vrot.slane %v56, %v60
    %vm63 = vcmask 64512
    %v65 = vsel %vm63, %v54, 0
    %67 = vmatprep.subr.mxu0 0.0
    %v68 = vand.u32 %v55, 4294901760
    %69 = vmatpush1.msra.mxu0 %v68
    %70 = vmatprep.subr.mxu0 0.0
    %71 = vmatpush1.msra.mxu0 0.0
    %72 = vmatprep.subr.mxu0 0.0
    %73 = vmatpush1.msra.mxu0 0.0
    %74 = vmatprep.subr.mxu0 0.0
    %75 = vmatpush1.msra.mxu0 0.0
    %76 = vmatprep.subr.mxu0 0.0
    %77 = vmatpush1.msra.mxu0 0.0
    %78 = vmatprep.subr.mxu0 0.0
    %79 = vmatpush1.msra.mxu0 0.0
    %80 = vmatprep.subr.mxu0 0.0
    %81 = vmatpush1.msra.mxu0 0.0
    %82 = vmatprep.subr.mxu0 0.0
    %83 = vmatpush1.msra.mxu0 0.0
    %84 = vmatprep.subr.mxu0 0.0
    %85 = vmatpush1.msra.mxu0 0.0
    %86 = vmatprep.subr.mxu0 0.0
    %87 = vmatpush1.msra.mxu0 0.0
    %88 = vmatprep.subr.mxu0 0.0
    %89 = vmatpush1.msra.mxu0 0.0
    %90 = vmatprep.subr.mxu0 0.0
    %91 = vmatpush1.msra.mxu0 0.0
    %92 = vmatprep.subr.mxu0 0.0
    %93 = vmatpush1.msra.mxu0 0.0
    %94 = vmatprep.subr.mxu0 0.0
    %95 = vmatpush1.msra.mxu0 0.0
    %96 = vmatprep.subr.mxu0 0.0
    %97 = vmatpush1.msra.mxu0 0.0
    %98 = vmatprep.subr.mxu0 0.0
    %99 = vmatpush1.msra.mxu0 0.0
    %100 = vmatprep.subr.mxu0 0.0
    %101 = vmatpush1.msra.mxu0 0.0
    %102 = vmatprep.subr.mxu0 0.0
    %103 = vmatpush1.msra.mxu0 0.0
    %104 = vmatprep.subr.mxu0 0.0
    %105 = vmatpush1.msra.mxu0 0.0
    %106 = vmatprep.subr.mxu0 0.0
    %107 = vmatpush1.msra.mxu0 0.0
    %108 = vmatprep.subr.mxu0 0.0
    %109 = vmatpush1.msra.mxu0 0.0
    %110 = vmatprep.subr.mxu0 0.0
    %111 = vmatpush1.msra.mxu0 0.0
    %112 = vmatprep.subr.mxu0 0.0
    %113 = vmatpush1.msra.mxu0 0.0
    %114 = vmatprep.subr.mxu0 0.0
    %115 = vmatpush1.msra.mxu0 0.0
    %116 = vmatprep.subr.mxu0 0.0
    %117 = vmatpush1.msra.mxu0 0.0
    %118 = vmatprep.subr.mxu0 0.0
    %119 = vmatpush1.msra.mxu0 0.0
    %120 = vmatprep.subr.mxu0 0.0
    %121 = vmatpush1.msra.mxu0 0.0
    %122 = vmatprep.subr.mxu0 0.0
    %123 = vmatpush1.msra.mxu0 0.0
    %124 = vmatprep.subr.mxu0 0.0
    %125 = vmatpush1.msra.mxu0 0.0
    %126 = vmatprep.subr.mxu0 0.0
    %127 = vmatpush1.msra.mxu0 0.0
    %128 = vmatprep.subr.mxu0 0.0
    %129 = vmatpush1.msra.mxu0 0.0
    %130 = vmatprep.subr.mxu0 0.0
    %131 = vmatpush1.msra.mxu0 0.0
    %132 = vmatprep.mubr.f32.mxu0 0.0
    %v133 = vand.u32 %v65, 4294901760
    %v134 = vsub.f32 %v65, %v133
    %v135 = vand.u32 %v134, 4294901760
    %v136 = vsub.f32 %v134, %v135
    %v137 = vand.u32 %v136, 4294901760
    %138 = vmatmul.mubr.f32.gmra.mrb[0].mxu0 %v137
    %v139 = vpop.f32.mrb[0].mxu0
    %v140 = vadd.f32 %v61, %v139
    %v141 = vpop.f32.mrb[0].mxu0
    %142 = vdwg.mxu0
    %143 = vmatprep.subr.mxu0 0.0
    %v144 = vand.u32 %v55, 4294901760
    %v145 = vsub.f32 %v55, %v144
    %v146 = vand.u32 %v145, 4294901760
    %v147 = vsub.f32 %v145, %v146
    %v148 = vand.u32 %v147, 4294901760
    %149 = vmatpush1.msra.mxu0 %v148
    %150 = vmatprep.subr.mxu0 0.0
    %151 = vmatpush1.msra.mxu0 0.0
    %152 = vmatprep.subr.mxu0 0.0
    %153 = vmatpush1.msra.mxu0 0.0
    %154 = vmatprep.subr.mxu0 0.0
    %155 = vmatpush1.msra.mxu0 0.0
    %156 = vmatprep.subr.mxu0 0.0
    %157 = vmatpush1.msra.mxu0 0.0
    %158 = vmatprep.subr.mxu0 0.0
    %159 = vmatpush1.msra.mxu0 0.0
    %160 = vmatprep.subr.mxu0 0.0
    %161 = vmatpush1.msra.mxu0 0.0
    %162 = vmatprep.subr.mxu0 0.0
    %163 = vmatpush1.msra.mxu0 0.0
    %164 = vmatprep.subr.mxu0 0.0
    %165 = vmatpush1.msra.mxu0 0.0
    %166 = vmatprep.subr.mxu0 0.0
    %167 = vmatpush1.msra.mxu0 0.0
    %168 = vmatprep.subr.mxu0 0.0
    %169 = vmatpush1.msra.mxu0 0.0
    %170 = vmatprep.subr.mxu0 0.0
    %171 = vmatpush1.msra.mxu0 0.0
    %172 = vmatprep.subr.mxu0 0.0
    %173 = vmatpush1.msra.mxu0 0.0
    %174 = vmatprep.subr.mxu0 0.0
    %175 = vmatpush1.msra.mxu0 0.0
    %176 = vmatprep.subr.mxu0 0.0
    %177 = vmatpush1.msra.mxu0 0.0
    %178 = vmatprep.subr.mxu0 0.0
    %179 = vmatpush1.msra.mxu0 0.0
    %180 = vmatprep.subr.mxu0 0.0
    %181 = vmatpush1.msra.mxu0 0.0
    %182 = vmatprep.subr.mxu0 0.0
    %183 = vmatpush1.msra.mxu0 0.0
    %184 = vmatprep.subr.mxu0 0.0
    %185 = vmatpush1.msra.mxu0 0.0
    %186 = vmatprep.subr.mxu0 0.0
    %187 = vmatpush1.msra.mxu0 0.0
    %188 = vmatprep.subr.mxu0 0.0
    %189 = vmatpush1.msra.mxu0 0.0
    %190 = vmatprep.subr.mxu0 0.0
    %191 = vmatpush1.msra.mxu0 0.0
    %192 = vmatprep.subr.mxu0 0.0
    %193 = vmatpush1.msra.mxu0 0.0
    %194 = vmatprep.subr.mxu0 0.0
    %195 = vmatpush1.msra.mxu0 0.0
    %196 = vmatprep.subr.mxu0 0.0
    %197 = vmatpush1.msra.mxu0 0.0
    %198 = vmatprep.subr.mxu0 0.0
    %199 = vmatpush1.msra.mxu0 0.0
    %200 = vmatprep.subr.mxu0 0.0
    %201 = vmatpush1.msra.mxu0 0.0
    %202 = vmatprep.subr.mxu0 0.0
    %203 = vmatpush1.msra.mxu0 0.0
    %204 = vmatprep.subr.mxu0 0.0
    %205 = vmatpush1.msra.mxu0 0.0
    %206 = vmatprep.subr.mxu0 0.0
    %207 = vmatpush1.msra.mxu0 0.0
    %208 = vmatprep.subr.mxu0 0.0
    %209 = vmatpush1.msra.mxu0 0.0
    %210 = vmatprep.subr.mxu0 0.0
    %211 = vmatpush1.msra.mxu0 0.0
    %212 = vmatprep.mubr.f32.mxu0 0.0
    %v213 = vand.u32 %v65, 4294901760
    %214 = vmatmul.mubr.f32.gmra.mrb[0].mxu0 %v213
    %v215 = vpop.f32.mrb[0].mxu0
    %v216 = vadd.f32 %v140, %v215
    %v217 = vpop.f32.mrb[0].mxu0
    %218 = vdwg.mxu0
    %219 = vmatprep.subr.mxu0 0.0
    %v220 = vand.u32 %v55, 4294901760
    %v221 = vsub.f32 %v55, %v220
    %222 = vmatpush1.msra.mxu0 %v221
    %223 = vmatprep.subr.mxu0 0.0
    %224 = vmatpush1.msra.mxu0 0.0
    %225 = vmatprep.subr.mxu0 0.0
    %226 = vmatpush1.msra.mxu0 0.0
    %227 = vmatprep.subr.mxu0 0.0
    %228 = vmatpush1.msra.mxu0 0.0
    %229 = vmatprep.subr.mxu0 0.0
    %230 = vmatpush1.msra.mxu0 0.0
    %231 = vmatprep.subr.mxu0 0.0
    %232 = vmatpush1.msra.mxu0 0.0
    %233 = vmatprep.subr.mxu0 0.0
    %234 = vmatpush1.msra.mxu0 0.0
    %235 = vmatprep.subr.mxu0 0.0
    %236 = vmatpush1.msra.mxu0 0.0
    %237 = vmatprep.subr.mxu0 0.0
    %238 = vmatpush1.msra.mxu0 0.0
    %239 = vmatprep.subr.mxu0 0.0
    %240 = vmatpush1.msra.mxu0 0.0
    %241 = vmatprep.subr.mxu0 0.0
    %242 = vmatpush1.msra.mxu0 0.0
    %243 = vmatprep.subr.mxu0 0.0
    %244 = vmatpush1.msra.mxu0 0.0
    %245 = vmatprep.subr.mxu0 0.0
    %246 = vmatpush1.msra.mxu0 0.0
    %247 = vmatprep.subr.mxu0 0.0
    %248 = vmatpush1.msra.mxu0 0.0
    %249 = vmatprep.subr.mxu0 0.0
    %250 = vmatpush1.msra.mxu0 0.0
    %251 = vmatprep.subr.mxu0 0.0
    %252 = vmatpush1.msra.mxu0 0.0
    %253 = vmatprep.subr.mxu0 0.0
    %254 = vmatpush1.msra.mxu0 0.0
    %255 = vmatprep.subr.mxu0 0.0
    %256 = vmatpush1.msra.mxu0 0.0
    %257 = vmatprep.subr.mxu0 0.0
    %258 = vmatpush1.msra.mxu0 0.0
    %259 = vmatprep.subr.mxu0 0.0
    %260 = vmatpush1.msra.mxu0 0.0
    %261 = vmatprep.subr.mxu0 0.0
    %262 = vmatpush1.msra.mxu0 0.0
    %263 = vmatprep.subr.mxu0 0.0
    %264 = vmatpush1.msra.mxu0 0.0
    %265 = vmatprep.subr.mxu0 0.0
    %266 = vmatpush1.msra.mxu0 0.0
    %267 = vmatprep.subr.mxu0 0.0
    %268 = vmatpush1.msra.mxu0 0.0
    %269 = vmatprep.subr.mxu0 0.0
    %270 = vmatpush1.msra.mxu0 0.0
    %271 = vmatprep.subr.mxu0 0.0
    %272 = vmatpush1.msra.mxu0 0.0
    %273 = vmatprep.subr.mxu0 0.0
    %274 = vmatpush1.msra.mxu0 0.0
    %275 = vmatprep.subr.mxu0 0.0
    %276 = vmatpush1.msra.mxu0 0.0
    %277 = vmatprep.subr.mxu0 0.0
    %278 = vmatpush1.msra.mxu0 0.0
    %279 = vmatprep.subr.mxu0 0.0
    %280 = vmatpush1.msra.mxu0 0.0
    %281 = vmatprep.subr.mxu0 0.0
    %282 = vmatpush1.msra.mxu0 0.0
    %283 = vmatprep.subr.mxu0 0.0
    %284 = vmatpush1.msra.mxu0 0.0
    %285 = vmatprep.mubr.f32.mxu0 0.0
    %v286 = vand.u32 %v65, 4294901760
    %v287 = vsub.f32 %v65, %v286
    %288 = vmatmul.mubr.f32.gmra.mrb[0].mxu0 %v287
    %v289 = vpop.f32.mrb[0].mxu0
    %v290 = vadd.f32 %v216, %v289
    %v291 = vpop.f32.mrb[0].mxu0
    %292 = vdwg.mxu0
    %293 = vmatprep.subr.mxu0 0.0
    %v294 = vand.u32 %v55, 4294901760
    %295 = vmatpush1.msra.mxu0 %v294
    %296 = vmatprep.subr.mxu0 0.0
    %297 = vmatpush1.msra.mxu0 0.0
    %298 = vmatprep.subr.mxu0 0.0
    %299 = vmatpush1.msra.mxu0 0.0
    %300 = vmatprep.subr.mxu0 0.0
    %301 = vmatpush1.msra.mxu0 0.0
    %302 = vmatprep.subr.mxu0 0.0
    %303 = vmatpush1.msra.mxu0 0.0
    %304 = vmatprep.subr.mxu0 0.0
    %305 = vmatpush1.msra.mxu0 0.0
    %306 = vmatprep.subr.mxu0 0.0
    %307 = vmatpush1.msra.mxu0 0.0
    %308 = vmatprep.subr.mxu0 0.0
    %309 = vmatpush1.msra.mxu0 0.0
    %310 = vmatprep.subr.mxu0 0.0
    %311 = vmatpush1.msra.mxu0 0.0
    %312 = vmatprep.subr.mxu0 0.0
    %313 = vmatpush1.msra.mxu0 0.0
    %314 = vmatprep.subr.mxu0 0.0
    %315 = vmatpush1.msra.mxu0 0.0
    %316 = vmatprep.subr.mxu0 0.0
    %317 = vmatpush1.msra.mxu0 0.0
    %318 = vmatprep.subr.mxu0 0.0
    %319 = vmatpush1.msra.mxu0 0.0
    %320 = vmatprep.subr.mxu0 0.0
    %321 = vmatpush1.msra.mxu0 0.0
    %322 = vmatprep.subr.mxu0 0.0
    %323 = vmatpush1.msra.mxu0 0.0
    %324 = vmatprep.subr.mxu0 0.0
    %325 = vmatpush1.msra.mxu0 0.0
    %326 = vmatprep.subr.mxu0 0.0
    %327 = vmatpush1.msra.mxu0 0.0
    %328 = vmatprep.subr.mxu0 0.0
    %329 = vmatpush1.msra.mxu0 0.0
    %330 = vmatprep.subr.mxu0 0.0
    %331 = vmatpush1.msra.mxu0 0.0
    %332 = vmatprep.subr.mxu0 0.0
    %333 = vmatpush1.msra.mxu0 0.0
    %334 = vmatprep.subr.mxu0 0.0
    %335 = vmatpush1.msra.mxu0 0.0
    %336 = vmatprep.subr.mxu0 0.0
    %337 = vmatpush1.msra.mxu0 0.0
    %338 = vmatprep.subr.mxu0 0.0
    %339 = vmatpush1.msra.mxu0 0.0
    %340 = vmatprep.subr.mxu0 0.0
    %341 = vmatpush1.msra.mxu0 0.0
    %342 = vmatprep.subr.mxu0 0.0
    %343 = vmatpush1.msra.mxu0 0.0
    %344 = vmatprep.subr.mxu0 0.0
    %345 = vmatpush1.msra.mxu0 0.0
    %346 = vmatprep.subr.mxu0 0.0
    %347 = vmatpush1.msra.mxu0 0.0
    %348 = vmatprep.subr.mxu0 0.0
    %349 = vmatpush1.msra.mxu0 0.0
    %350 = vmatprep.subr.mxu0 0.0
    %351 = vmatpush1.msra.mxu0 0.0
    %352 = vmatprep.subr.mxu0 0.0
    %353 = vmatpush1.msra.mxu0 0.0
    %354 = vmatprep.subr.mxu0 0.0
    %355 = vmatpush1.msra.mxu0 0.0
    %356 = vmatprep.subr.mxu0 0.0
    %357 = vmatpush1.msra.mxu0 0.0
    %358 = vmatprep.mubr.f32.mxu0 0.0
    %v359 = vand.u32 %v65, 4294901760
    %v360 = vsub.f32 %v65, %v359
    %v361 = vand.u32 %v360, 4294901760
    %362 = vmatmul.mubr.f32.gmra.mrb[0].mxu0 %v361
    %v363 = vpop.f32.mrb[0].mxu0
    %v364 = vadd.f32 %v290, %v363
    %v365 = vpop.f32.mrb[0].mxu0
    %366 = vdwg.mxu0
    %367 = vmatprep.subr.mxu0 0.0
    %v368 = vand.u32 %v55, 4294901760
    %v369 = vsub.f32 %v55, %v368
    %v370 = vand.u32 %v369, 4294901760
    %371 = vmatpush1.msra.mxu0 %v370
    %372 = vmatprep.subr.mxu0 0.0
    %373 = vmatpush1.msra.mxu0 0.0
    %374 = vmatprep.subr.mxu0 0.0
    %375 = vmatpush1.msra.mxu0 0.0
    %376 = vmatprep.subr.mxu0 0.0
    %377 = vmatpush1.msra.mxu0 0.0
    %378 = vmatprep.subr.mxu0 0.0
    %379 = vmatpush1.msra.mxu0 0.0
    %380 = vmatprep.subr.mxu0 0.0
    %381 = vmatpush1.msra.mxu0 0.0
    %382 = vmatprep.subr.mxu0 0.0
    %383 = vmatpush1.msra.mxu0 0.0
    %384 = vmatprep.subr.mxu0 0.0
    %385 = vmatpush1.msra.mxu0 0.0
    %386 = vmatprep.subr.mxu0 0.0
    %387 = vmatpush1.msra.mxu0 0.0
    %388 = vmatprep.subr.mxu0 0.0
    %389 = vmatpush1.msra.mxu0 0.0
    %390 = vmatprep.subr.mxu0 0.0
    %391 = vmatpush1.msra.mxu0 0.0
    %392 = vmatprep.subr.mxu0 0.0
    %393 = vmatpush1.msra.mxu0 0.0
    %394 = vmatprep.subr.mxu0 0.0
    %395 = vmatpush1.msra.mxu0 0.0
    %396 = vmatprep.subr.mxu0 0.0
    %397 = vmatpush1.msra.mxu0 0.0
    %398 = vmatprep.subr.mxu0 0.0
    %399 = vmatpush1.msra.mxu0 0.0
    %400 = vmatprep.subr.mxu0 0.0
    %401 = vmatpush1.msra.mxu0 0.0
    %402 = vmatprep.subr.mxu0 0.0
    %403 = vmatpush1.msra.mxu0 0.0
    %404 = vmatprep.subr.mxu0 0.0
    %405 = vmatpush1.msra.mxu0 0.0
    %406 = vmatprep.subr.mxu0 0.0
    %407 = vmatpush1.msra.mxu0 0.0
    %408 = vmatprep.subr.mxu0 0.0
    %409 = vmatpush1.msra.mxu0 0.0
    %410 = vmatprep.subr.mxu0 0.0
    %411 = vmatpush1.msra.mxu0 0.0
    %412 = vmatprep.subr.mxu0 0.0
    %413 = vmatpush1.msra.mxu0 0.0
    %414 = vmatprep.subr.mxu0 0.0
    %415 = vmatpush1.msra.mxu0 0.0
    %416 = vmatprep.subr.mxu0 0.0
    %417 = vmatpush1.msra.mxu0 0.0
    %418 = vmatprep.subr.mxu0 0.0
    %419 = vmatpush1.msra.mxu0 0.0
    %420 = vmatprep.subr.mxu0 0.0
    %421 = vmatpush1.msra.mxu0 0.0
    %422 = vmatprep.subr.mxu0 0.0
    %423 = vmatpush1.msra.mxu0 0.0
    %424 = vmatprep.subr.mxu0 0.0
    %425 = vmatpush1.msra.mxu0 0.0
    %426 = vmatprep.subr.mxu0 0.0
    %427 = vmatpush1.msra.mxu0 0.0
    %428 = vmatprep.subr.mxu0 0.0
    %429 = vmatpush1.msra.mxu0 0.0
    %430 = vmatprep.subr.mxu0 0.0
    %431 = vmatpush1.msra.mxu0 0.0
    %432 = vmatprep.subr.mxu0 0.0
    %433 = vmatpush1.msra.mxu0 0.0
    %434 = vmatprep.mubr.f32.mxu0 0.0
    %v435 = vand.u32 %v65, 4294901760
    %436 = vmatmul.mubr.f32.gmra.mrb[0].mxu0 %v435
    %v437 = vpop.f32.mrb[0].mxu0
    %v438 = vadd.f32 %v364, %v437
    %v439 = vpop.f32.mrb[0].mxu0
    %440 = vdwg.mxu0
    %441 = vmatprep.subr.mxu0 0.0
    %v442 = vand.u32 %v55, 4294901760
    %443 = vmatpush1.msra.mxu0 %v442
    %444 = vmatprep.subr.mxu0 0.0
    %445 = vmatpush1.msra.mxu0 0.0
    %446 = vmatprep.subr.mxu0 0.0
    %447 = vmatpush1.msra.mxu0 0.0
    %448 = vmatprep.subr.mxu0 0.0
    %449 = vmatpush1.msra.mxu0 0.0
    %450 = vmatprep.subr.mxu0 0.0
    %451 = vmatpush1.msra.mxu0 0.0
    %452 = vmatprep.subr.mxu0 0.0
    %453 = vmatpush1.msra.mxu0 0.0
    %454 = vmatprep.subr.mxu0 0.0
    %455 = vmatpush1.msra.mxu0 0.0
    %456 = vmatprep.subr.mxu0 0.0
    %457 = vmatpush1.msra.mxu0 0.0
    %458 = vmatprep.subr.mxu0 0.0
    %459 = vmatpush1.msra.mxu0 0.0
    %460 = vmatprep.subr.mxu0 0.0
    %461 = vmatpush1.msra.mxu0 0.0
    %462 = vmatprep.subr.mxu0 0.0
    %463 = vmatpush1.msra.mxu0 0.0
    %464 = vmatprep.subr.mxu0 0.0
    %465 = vmatpush1.msra.mxu0 0.0
    %466 = vmatprep.subr.mxu0 0.0
    %467 = vmatpush1.msra.mxu0 0.0
    %468 = vmatprep.subr.mxu0 0.0
    %469 = vmatpush1.msra.mxu0 0.0
    %470 = vmatprep.subr.mxu0 0.0
    %471 = vmatpush1.msra.mxu0 0.0
    %472 = vmatprep.subr.mxu0 0.0
    %473 = vmatpush1.msra.mxu0 0.0
    %474 = vmatprep.subr.mxu0 0.0
    %475 = vmatpush1.msra.mxu0 0.0
    %476 = vmatprep.subr.mxu0 0.0
    %477 = vmatpush1.msra.mxu0 0.0
    %478 = vmatprep.subr.mxu0 0.0
    %479 = vmatpush1.msra.mxu0 0.0
    %480 = vmatprep.subr.mxu0 0.0
    %481 = vmatpush1.msra.mxu0 0.0
    %482 = vmatprep.subr.mxu0 0.0
    %483 = vmatpush1.msra.mxu0 0.0
    %484 = vmatprep.subr.mxu0 0.0
    %485 = vmatpush1.msra.mxu0 0.0
    %486 = vmatprep.subr.mxu0 0.0
    %487 = vmatpush1.msra.mxu0 0.0
    %488 = vmatprep.subr.mxu0 0.0
    %489 = vmatpush1.msra.mxu0 0.0
    %490 = vmatprep.subr.mxu0 0.0
    %491 = vmatpush1.msra.mxu0 0.0
    %492 = vmatprep.subr.mxu0 0.0
    %493 = vmatpush1.msra.mxu0 0.0
    %494 = vmatprep.subr.mxu0 0.0
    %495 = vmatpush1.msra.mxu0 0.0
    %496 = vmatprep.subr.mxu0 0.0
    %497 = vmatpush1.msra.mxu0 0.0
    %498 = vmatprep.subr.mxu0 0.0
    %499 = vmatpush1.msra.mxu0 0.0
    %500 = vmatprep.subr.mxu0 0.0
    %501 = vmatpush1.msra.mxu0 0.0
    %502 = vmatprep.subr.mxu0 0.0
    %503 = vmatpush1.msra.mxu0 0.0
    %504 = vmatprep.subr.mxu0 0.0
    %505 = vmatpush1.msra.mxu0 0.0
    %506 = vmatprep.mubr.f32.mxu0 0.0
    %v507 = vand.u32 %v65, 4294901760
    %508 = vmatmul.mubr.f32.gmra.mrb[0].mxu0 %v507
    %v509 = vpop.f32.mrb[0].mxu0
    %v510 = vadd.f32 %v438, %v509
    %v511 = vpop.f32.mrb[0].mxu0
    %512 = vdwg.mxu0
    %v513 = vmax.f32 %v510, 0.0
    %v514 = vld [vmem:[#allocation2] sm:$0xff]
    %v515 = vld [vmem:[#allocation2 + $0x8] sm:$0xff]
    %v516 = vld [vmem:[#allocation2 + $0x10] sm:$0xff]
    %v517 = vld [vmem:[#allocation2 + $0x18] sm:$0xff]
    %v518 = vld [vmem:[%s4] sm:$0x1]
    %v520 = vlaneseq
    %v521 = vshrl.u32 %v520, 7
    %v522 = vsub.s32 0, %v521
    %v523 = vrot.slane %v518, %v522
    %vm525 = vcmask 261120
    %v527 = vsel %vm525, %v513, 0
    %529 = vmatprep.subr.mxu0 0.0
    %v530 = vand.u32 %v514, 4294901760
    %531 = vmatpush1.msra.mxu0 %v530
    %532 = vmatprep.subr.mxu0 0.0
    %v533 = vand.u32 %v515, 4294901760
    %534 = vmatpush1.msra.mxu0 %v533
    %535 = vmatprep.subr.mxu0 0.0
    %v536 = vand.u32 %v516, 4294901760
    %537 = vmatpush1.msra.mxu0 %v536
    %538 = vmatprep.subr.mxu0 0.0
    %v539 = vand.u32 %v517, 4294901760
    %540 = vmatpush1.msra.mxu0 %v539
    %541 = vmatprep.subr.mxu0 0.0
    %542 = vmatpush1.msra.mxu0 0.0
    %543 = vmatprep.subr.mxu0 0.0
    %544 = vmatpush1.msra.mxu0 0.0
    %545 = vmatprep.subr.mxu0 0.0
    %546 = vmatpush1.msra.mxu0 0.0
    %547 = vmatprep.subr.mxu0 0.0
    %548 = vmatpush1.msra.mxu0 0.0
    %549 = vmatprep.subr.mxu0 0.0
    %550 = vmatpush1.msra.mxu0 0.0
    %551 = vmatprep.subr.mxu0 0.0
    %552 = vmatpush1.msra.mxu0 0.0
    %553 = vmatprep.subr.mxu0 0.0
    %554 = vmatpush1.msra.mxu0 0.0
    %555 = vmatprep.subr.mxu0 0.0
    %556 = vmatpush1.msra.mxu0 0.0
    %557 = vmatprep.subr.mxu0 0.0
    %558 = vmatpush1.msra.mxu0 0.0
    %559 = vmatprep.subr.mxu0 0.0
    %560 = vmatpush1.msra.mxu0 0.0
    %561 = vmatprep.subr.mxu0 0.0
    %562 = vmatpush1.msra.mxu0 0.0
    %563 = vmatprep.subr.mxu0 0.0
    %564 = vmatpush1.msra.mxu0 0.0
    %565 = vmatprep.subr.mxu0 0.0
    %566 = vmatpush1.msra.mxu0 0.0
    %567 = vmatprep.subr.mxu0 0.0
    %568 = vmatpush1.msra.mxu0 0.0
    %569 = vmatprep.subr.mxu0 0.0
    %570 = vmatpush1.msra.mxu0 0.0
    %571 = vmatprep.subr.mxu0 0.0
    %572 = vmatpush1.msra.mxu0 0.0
    %573 = vmatprep.subr.mxu0 0.0
    %574 = vmatpush1.msra.mxu0 0.0
    %575 = vmatprep.subr.mxu0 0.0
    %576 = vmatpush1.msra.mxu0 0.0
    %577 = vmatprep.subr.mxu0 0.0
    %578 = vmatpush1.msra.mxu0 0.0
    %579 = vmatprep.subr.mxu0 0.0
    %580 = vmatpush1.msra.mxu0 0.0
    %581 = vmatprep.subr.mxu0 0.0
    %582 = vmatpush1.msra.mxu0 0.0
    %583 = vmatprep.subr.mxu0 0.0
    %584 = vmatpush1.msra.mxu0 0.0
    %585 = vmatprep.subr.mxu0 0.0
    %586 = vmatpush1.msra.mxu0 0.0
    %587 = vmatprep.subr.mxu0 0.0
    %588 = vmatpush1.msra.mxu0 0.0
    %589 = vmatprep.subr.mxu0 0.0
    %590 = vmatpush1.msra.mxu0 0.0
    %591 = vmatprep.subr.mxu0 0.0
    %592 = vmatpush1.msra.mxu0 0.0
    %593 = vmatprep.subr.mxu0 0.0
    %594 = vmatpush1.msra.mxu0 0.0
    %595 = vmatprep.subr.mxu0 0.0
    %596 = vmatpush1.msra.mxu0 0.0
    %597 = vmatprep.mubr.f32.mxu0 0.0
    %v598 = vand.u32 %v527, 4294901760
    %v599 = vsub.f32 %v527, %v598
    %v600 = vand.u32 %v599, 4294901760
    %v601 = vsub.f32 %v599, %v600
    %v602 = vand.u32 %v601, 4294901760
    %603 = vmatmul.mubr.f32.gmra.mrb[0].mxu0 %v602
    %v604 = vpop.f32.mrb[0].mxu0
    %v605 = vadd.f32 %v523, %v604
    %v606 = vpop.f32.mrb[0].mxu0
    %607 = vdwg.mxu0
    %608 = vmatprep.subr.mxu0 0.0
    %v609 = vand.u32 %v514, 4294901760
    %v610 = vsub.f32 %v514, %v609
    %v611 = vand.u32 %v610, 4294901760
    %v612 = vsub.f32 %v610, %v611
    %v613 = vand.u32 %v612, 4294901760
    %614 = vmatpush1.msra.mxu0 %v613
    %615 = vmatprep.subr.mxu0 0.0
    %v616 = vand.u32 %v515, 4294901760
    %v617 = vsub.f32 %v515, %v616
    %v618 = vand.u32 %v617, 4294901760
    %v619 = vsub.f32 %v617, %v618
    %v620 = vand.u32 %v619, 4294901760
    %621 = vmatpush1.msra.mxu0 %v620
    %622 = vmatprep.subr.mxu0 0.0
    %v623 = vand.u32 %v516, 4294901760
    %v624 = vsub.f32 %v516, %v623
    %v625 = vand.u32 %v624, 4294901760
    %v626 = vsub.f32 %v624, %v625
    %v627 = vand.u32 %v626, 4294901760
    %628 = vmatpush1.msra.mxu0 %v627
    %629 = vmatprep.subr.mxu0 0.0
    %v630 = vand.u32 %v517, 4294901760
    %v631 = vsub.f32 %v517, %v630
    %v632 = vand.u32 %v631, 4294901760
    %v633 = vsub.f32 %v631, %v632
    %v634 = vand.u32 %v633, 4294901760
    %635 = vmatpush1.msra.mxu0 %v634
    %636 = vmatprep.subr.mxu0 0.0
    %637 = vmatpush1.msra.mxu0 0.0
    %638 = vmatprep.subr.mxu0 0.0
    %639 = vmatpush1.msra.mxu0 0.0
    %640 = vmatprep.subr.mxu0 0.0
    %641 = vmatpush1.msra.mxu0 0.0
    %642 = vmatprep.subr.mxu0 0.0
    %643 = vmatpush1.msra.mxu0 0.0
    %644 = vmatprep.subr.mxu0 0.0
    %645 = vmatpush1.msra.mxu0 0.0
    %646 = vmatprep.subr.mxu0 0.0
    %647 = vmatpush1.msra.mxu0 0.0
    %648 = vmatprep.subr.mxu0 0.0
    %649 = vmatpush1.msra.mxu0 0.0
    %650 = vmatprep.subr.mxu0 0.0
    %651 = vmatpush1.msra.mxu0 0.0
    %652 = vmatprep.subr.mxu0 0.0
    %653 = vmatpush1.msra.mxu0 0.0
    %654 = vmatprep.subr.mxu0 0.0
    %655 = vmatpush1.msra.mxu0 0.0
    %656 = vmatprep.subr.mxu0 0.0
    %657 = vmatpush1.msra.mxu0 0.0
    %658 = vmatprep.subr.mxu0 0.0
    %659 = vmatpush1.msra.mxu0 0.0
    %660 = vmatprep.subr.mxu0 0.0
    %661 = vmatpush1.msra.mxu0 0.0
    %662 = vmatprep.subr.mxu0 0.0
    %663 = vmatpush1.msra.mxu0 0.0
    %664 = vmatprep.subr.mxu0 0.0
    %665 = vmatpush1.msra.mxu0 0.0
    %666 = vmatprep.subr.mxu0 0.0
    %667 = vmatpush1.msra.mxu0 0.0
    %668 = vmatprep.subr.mxu0 0.0
    %669 = vmatpush1.msra.mxu0 0.0
    %670 = vmatprep.subr.mxu0 0.0
    %671 = vmatpush1.msra.mxu0 0.0
    %672 = vmatprep.subr.mxu0 0.0
    %673 = vmatpush1.msra.mxu0 0.0
    %674 = vmatprep.subr.mxu0 0.0
    %675 = vmatpush1.msra.mxu0 0.0
    %676 = vmatprep.subr.mxu0 0.0
    %677 = vmatpush1.msra.mxu0 0.0
    %678 = vmatprep.subr.mxu0 0.0
    %679 = vmatpush1.msra.mxu0 0.0
    %680 = vmatprep.subr.mxu0 0.0
    %681 = vmatpush1.msra.mxu0 0.0
    %682 = vmatprep.subr.mxu0 0.0
    %683 = vmatpush1.msra.mxu0 0.0
    %684 = vmatprep.subr.mxu0 0.0
    %685 = vmatpush1.msra.mxu0 0.0
    %686 = vmatprep.subr.mxu0 0.0
    %687 = vmatpush1.msra.mxu0 0.0
    %688 = vmatprep.subr.mxu0 0.0
    %689 = vmatpush1.msra.mxu0 0.0
    %690 = vmatprep.subr.mxu0 0.0
    %691 = vmatpush1.msra.mxu0 0.0
    %692 = vmatprep.mubr.f32.mxu0 0.0
    %v693 = vand.u32 %v527, 4294901760
    %694 = vmatmul.mubr.f32.gmra.mrb[0].mxu0 %v693
    %v695 = vpop.f32.mrb[0].mxu0
    %v696 = vadd.f32 %v605, %v695
    %v697 = vpop.f32.mrb[0].mxu0
    %698 = vdwg.mxu0
    %699 = vmatprep.subr.mxu0 0.0
    %v700 = vand.u32 %v514, 4294901760
    %v701 = vsub.f32 %v514, %v700
    %702 = vmatpush1.msra.mxu0 %v701
    %703 = vmatprep.subr.mxu0 0.0
    %v704 = vand.u32 %v515, 4294901760
    %v705 = vsub.f32 %v515, %v704
    %706 = vmatpush1.msra.mxu0 %v705
    %707 = vmatprep.subr.mxu0 0.0
    %v708 = vand.u32 %v516, 4294901760
    %v709 = vsub.f32 %v516, %v708
    %710 = vmatpush1.msra.mxu0 %v709
    %711 = vmatprep.subr.mxu0 0.0
    %v712 = vand.u32 %v517, 4294901760
    %v713 = vsub.f32 %v517, %v712
    %714 = vmatpush1.msra.mxu0 %v713
    %715 = vmatprep.subr.mxu0 0.0
    %716 = vmatpush1.msra.mxu0 0.0
    %717 = vmatprep.subr.mxu0 0.0
    %718 = vmatpush1.msra.mxu0 0.0
    %719 = vmatprep.subr.mxu0 0.0
    %720 = vmatpush1.msra.mxu0 0.0
    %721 = vmatprep.subr.mxu0 0.0
    %722 = vmatpush1.msra.mxu0 0.0
    %723 = vmatprep.subr.mxu0 0.0
    %724 = vmatpush1.msra.mxu0 0.0
    %725 = vmatprep.subr.mxu0 0.0
    %726 = vmatpush1.msra.mxu0 0.0
    %727 = vmatprep.subr.mxu0 0.0
    %728 = vmatpush1.msra.mxu0 0.0
    %729 = vmatprep.subr.mxu0 0.0
    %730 = vmatpush1.msra.mxu0 0.0
    %731 = vmatprep.subr.mxu0 0.0
    %732 = vmatpush1.msra.mxu0 0.0
    %733 = vmatprep.subr.mxu0 0.0
    %734 = vmatpush1.msra.mxu0 0.0
    %735 = vmatprep.subr.mxu0 0.0
    %736 = vmatpush1.msra.mxu0 0.0
    %737 = vmatprep.subr.mxu0 0.0
    %738 = vmatpush1.msra.mxu0 0.0
    %739 = vmatprep.subr.mxu0 0.0
    %740 = vmatpush1.msra.mxu0 0.0
    %741 = vmatprep.subr.mxu0 0.0
    %742 = vmatpush1.msra.mxu0 0.0
    %743 = vmatprep.subr.mxu0 0.0
    %744 = vmatpush1.msra.mxu0 0.0
    %745 = vmatprep.subr.mxu0 0.0
    %746 = vmatpush1.msra.mxu0 0.0
    %747 = vmatprep.subr.mxu0 0.0
    %748 = vmatpush1.msra.mxu0 0.0
    %749 = vmatprep.subr.mxu0 0.0
    %750 = vmatpush1.msra.mxu0 0.0
    %751 = vmatprep.subr.mxu0 0.0
    %752 = vmatpush1.msra.mxu0 0.0
    %753 = vmatprep.subr.mxu0 0.0
    %754 = vmatpush1.msra.mxu0 0.0
    %755 = vmatprep.subr.mxu0 0.0
    %756 = vmatpush1.msra.mxu0 0.0
    %757 = vmatprep.subr.mxu0 0.0
    %758 = vmatpush1.msra.mxu0 0.0
    %759 = vmatprep.subr.mxu0 0.0
    %760 = vmatpush1.msra.mxu0 0.0
    %761 = vmatprep.subr.mxu0 0.0
    %762 = vmatpush1.msra.mxu0 0.0
    %763 = vmatprep.subr.mxu0 0.0
    %764 = vmatpush1.msra.mxu0 0.0
    %765 = vmatprep.subr.mxu0 0.0
    %766 = vmatpush1.msra.mxu0 0.0
    %767 = vmatprep.subr.mxu0 0.0
    %768 = vmatpush1.msra.mxu0 0.0
    %769 = vmatprep.subr.mxu0 0.0
    %770 = vmatpush1.msra.mxu0 0.0
    %771 = vmatprep.mubr.f32.mxu0 0.0
    %v772 = vand.u32 %v527, 4294901760
    %v773 = vsub.f32 %v527, %v772
    %774 = vmatmul.mubr.f32.gmra.mrb[0].mxu0 %v773
    %v775 = vpop.f32.mrb[0].mxu0
    %v776 = vadd.f32 %v696, %v775
    %v777 = vpop.f32.mrb[0].mxu0
    %778 = vdwg.mxu0
    %779 = vmatprep.subr.mxu0 0.0
    %v780 = vand.u32 %v514, 4294901760
    %781 = vmatpush1.msra.mxu0 %v780
    %782 = vmatprep.subr.mxu0 0.0
    %v783 = vand.u32 %v515, 4294901760
    %784 = vmatpush1.msra.mxu0 %v783
    %785 = vmatprep.subr.mxu0 0.0
    %v786 = vand.u32 %v516, 4294901760
    %787 = vmatpush1.msra.mxu0 %v786
    %788 = vmatprep.subr.mxu0 0.0
    %v789 = vand.u32 %v517, 4294901760
    %790 = vmatpush1.msra.mxu0 %v789
    %791 = vmatprep.subr.mxu0 0.0
    %792 = vmatpush1.msra.mxu0 0.0
    %793 = vmatprep.subr.mxu0 0.0
    %794 = vmatpush1.msra.mxu0 0.0
    %795 = vmatprep.subr.mxu0 0.0
    %796 = vmatpush1.msra.mxu0 0.0
    %797 = vmatprep.subr.mxu0 0.0
    %798 = vmatpush1.msra.mxu0 0.0
    %799 = vmatprep.subr.mxu0 0.0
    %800 = vmatpush1.msra.mxu0 0.0
    %801 = vmatprep.subr.mxu0 0.0
    %802 = vmatpush1.msra.mxu0 0.0
    %803 = vmatprep.subr.mxu0 0.0
    %804 = vmatpush1.msra.mxu0 0.0
    %805 = vmatprep.subr.mxu0 0.0
    %806 = vmatpush1.msra.mxu0 0.0
    %807 = vmatprep.subr.mxu0 0.0
    %808 = vmatpush1.msra.mxu0 0.0
    %809 = vmatprep.subr.mxu0 0.0
    %810 = vmatpush1.msra.mxu0 0.0
    %811 = vmatprep.subr.mxu0 0.0
    %812 = vmatpush1.msra.mxu0 0.0
    %813 = vmatprep.subr.mxu0 0.0
    %814 = vmatpush1.msra.mxu0 0.0
    %815 = vmatprep.subr.mxu0 0.0
    %816 = vmatpush1.msra.mxu0 0.0
    %817 = vmatprep.subr.mxu0 0.0
    %818 = vmatpush1.msra.mxu0 0.0
    %819 = vmatprep.subr.mxu0 0.0
    %820 = vmatpush1.msra.mxu0 0.0
    %821 = vmatprep.subr.mxu0 0.0
    %822 = vmatpush1.msra.mxu0 0.0
    %823 = vmatprep.subr.mxu0 0.0
    %824 = vmatpush1.msra.mxu0 0.0
    %825 = vmatprep.subr.mxu0 0.0
    %826 = vmatpush1.msra.mxu0 0.0
    %827 = vmatprep.subr.mxu0 0.0
    %828 = vmatpush1.msra.mxu0 0.0
    %829 = vmatprep.subr.mxu0 0.0
    %830 = vmatpush1.msra.mxu0 0.0
    %831 = vmatprep.subr.mxu0 0.0
    %832 = vmatpush1.msra.mxu0 0.0
    %833 = vmatprep.subr.mxu0 0.0
    %834 = vmatpush1.msra.mxu0 0.0
    %835 = vmatprep.subr.mxu0 0.0
    %836 = vmatpush1.msra.mxu0 0.0
    %837 = vmatprep.subr.mxu0 0.0
    %838 = vmatpush1.msra.mxu0 0.0
    %839 = vmatprep.subr.mxu0 0.0
    %840 = vmatpush1.msra.mxu0 0.0
    %841 = vmatprep.subr.mxu0 0.0
    %842 = vmatpush1.msra.mxu0 0.0
    %843 = vmatprep.subr.mxu0 0.0
    %844 = vmatpush1.msra.mxu0 0.0
    %845 = vmatprep.subr.mxu0 0.0
    %846 = vmatpush1.msra.mxu0 0.0
    %847 = vmatprep.mubr.f32.mxu0 0.0
    %v848 = vand.u32 %v527, 4294901760
    %v849 = vsub.f32 %v527, %v848
    %v850 = vand.u32 %v849, 4294901760
    %851 = vmatmul.mubr.f32.gmra.mrb[0].mxu0 %v850
    %v852 = vpop.f32.mrb[0].mxu0
    %v853 = vadd.f32 %v776, %v852
    %v854 = vpop.f32.mrb[0].mxu0
    %855 = vdwg.mxu0
    %856 = vmatprep.subr.mxu0 0.0
    %v857 = vand.u32 %v514, 4294901760
    %v858 = vsub.f32 %v514, %v857
    %v859 = vand.u32 %v858, 4294901760
    %860 = vmatpush1.msra.mxu0 %v859
    %861 = vmatprep.subr.mxu0 0.0
    %v862 = vand.u32 %v515, 4294901760
    %v863 = vsub.f32 %v515, %v862
    %v864 = vand.u32 %v863, 4294901760
    %865 = vmatpush1.msra.mxu0 %v864
    %866 = vmatprep.subr.mxu0 0.0
    %v867 = vand.u32 %v516, 4294901760
    %v868 = vsub.f32 %v516, %v867
    %v869 = vand.u32 %v868, 4294901760
    %870 = vmatpush1.msra.mxu0 %v869
    %871 = vmatprep.subr.mxu0 0.0
    %v872 = vand.u32 %v517, 4294901760
    %v873 = vsub.f32 %v517, %v872
    %v874 = vand.u32 %v873, 4294901760
    %875 = vmatpush1.msra.mxu0 %v874
    %876 = vmatprep.subr.mxu0 0.0
    %877 = vmatpush1.msra.mxu0 0.0
    %878 = vmatprep.subr.mxu0 0.0
    %879 = vmatpush1.msra.mxu0 0.0
    %880 = vmatprep.subr.mxu0 0.0
    %881 = vmatpush1.msra.mxu0 0.0
    %882 = vmatprep.subr.mxu0 0.0
    %883 = vmatpush1.msra.mxu0 0.0
    %884 = vmatprep.subr.mxu0 0.0
    %885 = vmatpush1.msra.mxu0 0.0
    %886 = vmatprep.subr.mxu0 0.0
    %887 = vmatpush1.msra.mxu0 0.0
    %888 = vmatprep.subr.mxu0 0.0
    %889 = vmatpush1.msra.mxu0 0.0
    %890 = vmatprep.subr.mxu0 0.0
    %891 = vmatpush1.msra.mxu0 0.0
    %892 = vmatprep.subr.mxu0 0.0
    %893 = vmatpush1.msra.mxu0 0.0
    %894 = vmatprep.subr.mxu0 0.0
    %895 = vmatpush1.msra.mxu0 0.0
    %896 = vmatprep.subr.mxu0 0.0
    %897 = vmatpush1.msra.mxu0 0.0
    %898 = vmatprep.subr.mxu0 0.0
    %899 = vmatpush1.msra.mxu0 0.0
    %900 = vmatprep.subr.mxu0 0.0
    %901 = vmatpush1.msra.mxu0 0.0
    %902 = vmatprep.subr.mxu0 0.0
    %903 = vmatpush1.msra.mxu0 0.0
    %904 = vmatprep.subr.mxu0 0.0
    %905 = vmatpush1.msra.mxu0 0.0
    %906 = vmatprep.subr.mxu0 0.0
    %907 = vmatpush1.msra.mxu0 0.0
    %908 = vmatprep.subr.mxu0 0.0
    %909 = vmatpush1.msra.mxu0 0.0
    %910 = vmatprep.subr.mxu0 0.0
    %911 = vmatpush1.msra.mxu0 0.0
    %912 = vmatprep.subr.mxu0 0.0
    %913 = vmatpush1.msra.mxu0 0.0
    %914 = vmatprep.subr.mxu0 0.0
    %915 = vmatpush1.msra.mxu0 0.0
    %916 = vmatprep.subr.mxu0 0.0
    %917 = vmatpush1.msra.mxu0 0.0
    %918 = vmatprep.subr.mxu0 0.0
    %919 = vmatpush1.msra.mxu0 0.0
    %920 = vmatprep.subr.mxu0 0.0
    %921 = vmatpush1.msra.mxu0 0.0
    %922 = vmatprep.subr.mxu0 0.0
    %923 = vmatpush1.msra.mxu0 0.0
    %924 = vmatprep.subr.mxu0 0.0
    %925 = vmatpush1.msra.mxu0 0.0
    %926 = vmatprep.subr.mxu0 0.0
    %927 = vmatpush1.msra.mxu0 0.0
    %928 = vmatprep.subr.mxu0 0.0
    %929 = vmatpush1.msra.mxu0 0.0
    %930 = vmatprep.subr.mxu0 0.0
    %931 = vmatpush1.msra.mxu0 0.0
    %932 = vmatprep.mubr.f32.mxu0 0.0
    %v933 = vand.u32 %v527, 4294901760
    %934 = vmatmul.mubr.f32.gmra.mrb[0].mxu0 %v933
    %v935 = vpop.f32.mrb[0].mxu0
    %v936 = vadd.f32 %v853, %v935
    %v937 = vpop.f32.mrb[0].mxu0
    %938 = vdwg.mxu0
    %939 = vmatprep.subr.mxu0 0.0
    %v940 = vand.u32 %v514, 4294901760
    %941 = vmatpush1.msra.mxu0 %v940
    %942 = vmatprep.subr.mxu0 0.0
    %v943 = vand.u32 %v515, 4294901760
    %944 = vmatpush1.msra.mxu0 %v943
    %945 = vmatprep.subr.mxu0 0.0
    %v946 = vand.u32 %v516, 4294901760
    %947 = vmatpush1.msra.mxu0 %v946
    %948 = vmatprep.subr.mxu0 0.0
    %v949 = vand.u32 %v517, 4294901760
    %950 = vmatpush1.msra.mxu0 %v949
    %951 = vmatprep.subr.mxu0 0.0
    %952 = vmatpush1.msra.mxu0 0.0
    %953 = vmatprep.subr.mxu0 0.0
    %954 = vmatpush1.msra.mxu0 0.0
    %955 = vmatprep.subr.mxu0 0.0
    %956 = vmatpush1.msra.mxu0 0.0
    %957 = vmatprep.subr.mxu0 0.0
    %958 = vmatpush1.msra.mxu0 0.0
    %959 = vmatprep.subr.mxu0 0.0
    %960 = vmatpush1.msra.mxu0 0.0
    %961 = vmatprep.subr.mxu0 0.0
    %962 = vmatpush1.msra.mxu0 0.0
    %963 = vmatprep.subr.mxu0 0.0
    %964 = vmatpush1.msra.mxu0 0.0
    %965 = vmatprep.subr.mxu0 0.0
    %966 = vmatpush1.msra.mxu0 0.0
    %967 = vmatprep.subr.mxu0 0.0
    %968 = vmatpush1.msra.mxu0 0.0
    %969 = vmatprep.subr.mxu0 0.0
    %970 = vmatpush1.msra.mxu0 0.0
    %971 = vmatprep.subr.mxu0 0.0
    %972 = vmatpush1.msra.mxu0 0.0
    %973 = vmatprep.subr.mxu0 0.0
    %974 = vmatpush1.msra.mxu0 0.0
    %975 = vmatprep.subr.mxu0 0.0
    %976 = vmatpush1.msra.mxu0 0.0
    %977 = vmatprep.subr.mxu0 0.0
    %978 = vmatpush1.msra.mxu0 0.0
    %979 = vmatprep.subr.mxu0 0.0
    %980 = vmatpush1.msra.mxu0 0.0
    %981 = vmatprep.subr.mxu0 0.0
    %982 = vmatpush1.msra.mxu0 0.0
    %983 = vmatprep.subr.mxu0 0.0
    %984 = vmatpush1.msra.mxu0 0.0
    %985 = vmatprep.subr.mxu0 0.0
    %986 = vmatpush1.msra.mxu0 0.0
    %987 = vmatprep.subr.mxu0 0.0
    %988 = vmatpush1.msra.mxu0 0.0
    %989 = vmatprep.subr.mxu0 0.0
    %990 = vmatpush1.msra.mxu0 0.0
    %991 = vmatprep.subr.mxu0 0.0
    %992 = vmatpush1.msra.mxu0 0.0
    %993 = vmatprep.subr.mxu0 0.0
    %994 = vmatpush1.msra.mxu0 0.0
    %995 = vmatprep.subr.mxu0 0.0
    %996 = vmatpush1.msra.mxu0 0.0
    %997 = vmatprep.subr.mxu0 0.0
    %998 = vmatpush1.msra.mxu0 0.0
    %999 = vmatprep.subr.mxu0 0.0
    %1000 = vmatpush1.msra.mxu0 0.0
    %1001 = vmatprep.subr.mxu0 0.0
    %1002 = vmatpush1.msra.mxu0 0.0
    %1003 = vmatprep.subr.mxu0 0.0
    %1004 = vmatpush1.msra.mxu0 0.0
    %1005 = vmatprep.subr.mxu0 0.0
    %1006 = vmatpush1.msra.mxu0 0.0
    %1007 = vmatprep.mubr.f32.mxu0 0.0
    %v1008 = vand.u32 %v527, 4294901760
    %1009 = vmatmul.mubr.f32.gmra.mrb[0].mxu0 %v1008
    %v1010 = vpop.f32.mrb[0].mxu0
    %v1011 = vadd.f32 %v936, %v1010
    %v1012 = vpop.f32.mrb[0].mxu0
    %1013 = vdwg.mxu0
    %v1014 = vmax.f32 %v1011, 0.0
    %v1015 = vld [vmem:[#allocation4] sm:$0xff]
    %v1016 = vld [vmem:[#allocation4 + $0x8] sm:$0xff]
    %v1017 = vld [vmem:[#allocation4 + $0x10] sm:$0xff]
    %v1018 = vld [vmem:[#allocation4 + $0x18] sm:$0xff]
    %v1019 = vld [vmem:[#allocation4 + $0x20] sm:$0xff]
    %v1020 = vld [vmem:[#allocation4 + $0x28] sm:$0xff]
    %v1021 = vld [vmem:[#allocation4 + $0x30] sm:$0xff]
    %v1022 = vld [vmem:[#allocation4 + $0x38] sm:$0xff]
    %v1023 = vld [vmem:[%s6] sm:$0x1]
    %v1025 = vlaneseq
    %v1026 = vshrl.u32 %v1025, 7
    %v1027 = vsub.s32 0, %v1026
    %v1028 = vrot.slane %v1023, %v1027
    %vm1030 = vcmask 523264
    %v1032 = vsel %vm1030, %v1014, 0
    %1034 = vmatprep.subr.mxu0 0.0
    %v1035 = vand.u32 %v1015, 4294901760
    %1036 = vmatpush1.msra.mxu0 %v1035
    %1037 = vmatprep.subr.mxu0 0.0
    %v1038 = vand.u32 %v1016, 4294901760
    %1039 = vmatpush1.msra.mxu0 %v1038
    %1040 = vmatprep.subr.mxu0 0.0
    %v1041 = vand.u32 %v1017, 4294901760
    %1042 = vmatpush1.msra.mxu0 %v1041
    %1043 = vmatprep.subr.mxu0 0.0
    %v1044 = vand.u32 %v1018, 4294901760
    %1045 = vmatpush1.msra.mxu0 %v1044
    %1046 = vmatprep.subr.mxu0 0.0
    %v1047 = vand.u32 %v1019, 4294901760
    %1048 = vmatpush1.msra.mxu0 %v1047
    %1049 = vmatprep.subr.mxu0 0.0
    %v1050 = vand.u32 %v1020, 4294901760
    %1051 = vmatpush1.msra.mxu0 %v1050
    %1052 = vmatprep.subr.mxu0 0.0
    %v1053 = vand.u32 %v1021, 4294901760
    %1054 = vmatpush1.msra.mxu0 %v1053
    %1055 = vmatprep.subr.mxu0 0.0
    %v1056 = vand.u32 %v1022, 4294901760
    %1057 = vmatpush1.msra.mxu0 %v1056
    %1058 = vmatprep.subr.mxu0 0.0
    %1059 = vmatpush1.msra.mxu0 0.0
    %1060 = vmatprep.subr.mxu0 0.0
    %1061 = vmatpush1.msra.mxu0 0.0
    %1062 = vmatprep.subr.mxu0 0.0
    %1063 = vmatpush1.msra.mxu0 0.0
    %1064 = vmatprep.subr.mxu0 0.0
    %1065 = vmatpush1.msra.mxu0 0.0
    %1066 = vmatprep.subr.mxu0 0.0
    %1067 = vmatpush1.msra.mxu0 0.0
    %1068 = vmatprep.subr.mxu0 0.0
    %1069 = vmatpush1.msra.mxu0 0.0
    %1070 = vmatprep.subr.mxu0 0.0
    %1071 = vmatpush1.msra.mxu0 0.0
    %1072 = vmatprep.subr.mxu0 0.0
    %1073 = vmatpush1.msra.mxu0 0.0
    %1074 = vmatprep.subr.mxu0 0.0
    %1075 = vmatpush1.msra.mxu0 0.0
    %1076 = vmatprep.subr.mxu0 0.0
    %1077 = vmatpush1.msra.mxu0 0.0
    %1078 = vmatprep.subr.mxu0 0.0
    %1079 = vmatpush1.msra.mxu0 0.0
    %1080 = vmatprep.subr.mxu0 0.0
    %1081 = vmatpush1.msra.mxu0 0.0
    %1082 = vmatprep.subr.mxu0 0.0
    %1083 = vmatpush1.msra.mxu0 0.0
    %1084 = vmatprep.subr.mxu0 0.0
    %1085 = vmatpush1.msra.mxu0 0.0
    %1086 = vmatprep.subr.mxu0 0.0
    %1087 = vmatpush1.msra.mxu0 0.0
    %1088 = vmatprep.subr.mxu0 0.0
    %1089 = vmatpush1.msra.mxu0 0.0
    %1090 = vmatprep.subr.mxu0 0.0
    %1091 = vmatpush1.msra.mxu0 0.0
    %1092 = vmatprep.subr.mxu0 0.0
    %1093 = vmatpush1.msra.mxu0 0.0
    %1094 = vmatprep.subr.mxu0 0.0
    %1095 = vmatpush1.msra.mxu0 0.0
    %1096 = vmatprep.subr.mxu0 0.0
    %1097 = vmatpush1.msra.mxu0 0.0
    %1098 = vmatprep.subr.mxu0 0.0
    %1099 = vmatpush1.msra.mxu0 0.0
    %1100 = vmatprep.subr.mxu0 0.0
    %1101 = vmatpush1.msra.mxu0 0.0
    %1102 = vmatprep.subr.mxu0 0.0
    %1103 = vmatpush1.msra.mxu0 0.0
    %1104 = vmatprep.subr.mxu0 0.0
    %1105 = vmatpush1.msra.mxu0 0.0
    %1106 = vmatprep.mubr.f32.mxu0 0.0
    %v1107 = vand.u32 %v1032, 4294901760
    %v1108 = vsub.f32 %v1032, %v1107
    %v1109 = vand.u32 %v1108, 4294901760
    %v1110 = vsub.f32 %v1108, %v1109
    %v1111 = vand.u32 %v1110, 4294901760
    %1112 = vmatmul.mubr.f32.gmra.mrb[0].mxu0 %v1111
    %v1113 = vpop.f32.mrb[0].mxu0
    %v1114 = vadd.f32 %v1028, %v1113
    %v1115 = vpop.f32.mrb[0].mxu0
    %1116 = vdwg.mxu0
    %1117 = vmatprep.subr.mxu0 0.0
    %v1118 = vand.u32 %v1015, 4294901760
    %v1119 = vsub.f32 %v1015, %v1118
    %v1120 = vand.u32 %v1119, 4294901760
    %v1121 = vsub.f32 %v1119, %v1120
    %v1122 = vand.u32 %v1121, 4294901760
    %1123 = vmatpush1.msra.mxu0 %v1122
    %1124 = vmatprep.subr.mxu0 0.0
    %v1125 = vand.u32 %v1016, 4294901760
    %v1126 = vsub.f32 %v1016, %v1125
    %v1127 = vand.u32 %v1126, 4294901760
    %v1128 = vsub.f32 %v1126, %v1127
    %v1129 = vand.u32 %v1128, 4294901760
    %1130 = vmatpush1.msra.mxu0 %v1129
    %1131 = vmatprep.subr.mxu0 0.0
    %v1132 = vand.u32 %v1017, 4294901760
    %v1133 = vsub.f32 %v1017, %v1132
    %v1134 = vand.u32 %v1133, 4294901760
    %v1135 = vsub.f32 %v1133, %v1134
    %v1136 = vand.u32 %v1135, 4294901760
    %1137 = vmatpush1.msra.mxu0 %v1136
    %1138 = vmatprep.subr.mxu0 0.0
    %v1139 = vand.u32 %v1018, 4294901760
    %v1140 = vsub.f32 %v1018, %v1139
    %v1141 = vand.u32 %v1140, 4294901760
    %v1142 = vsub.f32 %v1140, %v1141
    %v1143 = vand.u32 %v1142, 4294901760
    %1144 = vmatpush1.msra.mxu0 %v1143
    %1145 = vmatprep.subr.mxu0 0.0
    %v1146 = vand.u32 %v1019, 4294901760
    %v1147 = vsub.f32 %v1019, %v1146
    %v1148 = vand.u32 %v1147, 4294901760
    %v1149 = vsub.f32 %v1147, %v1148
    %v1150 = vand.u32 %v1149, 4294901760
    %1151 = vmatpush1.msra.mxu0 %v1150
    %1152 = vmatprep.subr.mxu0 0.0
    %v1153 = vand.u32 %v1020, 4294901760
    %v1154 = vsub.f32 %v1020, %v1153
    %v1155 = vand.u32 %v1154, 4294901760
    %v1156 = vsub.f32 %v1154, %v1155
    %v1157 = vand.u32 %v1156, 4294901760
    %1158 = vmatpush1.msra.mxu0 %v1157
    %1159 = vmatprep.subr.mxu0 0.0
    %v1160 = vand.u32 %v1021, 4294901760
    %v1161 = vsub.f32 %v1021, %v1160
    %v1162 = vand.u32 %v1161, 4294901760
    %v1163 = vsub.f32 %v1161, %v1162
    %v1164 = vand.u32 %v1163, 4294901760
    %1165 = vmatpush1.msra.mxu0 %v1164
    %1166 = vmatprep.subr.mxu0 0.0
    %v1167 = vand.u32 %v1022, 4294901760
    %v1168 = vsub.f32 %v1022, %v1167
    %v1169 = vand.u32 %v1168, 4294901760
    %v1170 = vsub.f32 %v1168, %v1169
    %v1171 = vand.u32 %v1170, 4294901760
    %1172 = vmatpush1.msra.mxu0 %v1171
    %1173 = vmatprep.subr.mxu0 0.0
    %1174 = vmatpush1.msra.mxu0 0.0
    %1175 = vmatprep.subr.mxu0 0.0
    %1176 = vmatpush1.msra.mxu0 0.0
    %1177 = vmatprep.subr.mxu0 0.0
    %1178 = vmatpush1.msra.mxu0 0.0
    %1179 = vmatprep.subr.mxu0 0.0
    %1180 = vmatpush1.msra.mxu0 0.0
    %1181 = vmatprep.subr.mxu0 0.0
    %1182 = vmatpush1.msra.mxu0 0.0
    %1183 = vmatprep.subr.mxu0 0.0
    %1184 = vmatpush1.msra.mxu0 0.0
    %1185 = vmatprep.subr.mxu0 0.0
    %1186 = vmatpush1.msra.mxu0 0.0
    %1187 = vmatprep.subr.mxu0 0.0
    %1188 = vmatpush1.msra.mxu0 0.0
    %1189 = vmatprep.subr.mxu0 0.0
    %1190 = vmatpush1.msra.mxu0 0.0
    %1191 = vmatprep.subr.mxu0 0.0
    %1192 = vmatpush1.msra.mxu0 0.0
    %1193 = vmatprep.subr.mxu0 0.0
    %1194 = vmatpush1.msra.mxu0 0.0
    %1195 = vmatprep.subr.mxu0 0.0
    %1196 = vmatpush1.msra.mxu0 0.0
    %1197 = vmatprep.subr.mxu0 0.0
    %1198 = vmatpush1.msra.mxu0 0.0
    %1199 = vmatprep.subr.mxu0 0.0
    %1200 = vmatpush1.msra.mxu0 0.0
    %1201 = vmatprep.subr.mxu0 0.0
    %1202 = vmatpush1.msra.mxu0 0.0
    %1203 = vmatprep.subr.mxu0 0.0
    %1204 = vmatpush1.msra.mxu0 0.0
    %1205 = vmatprep.subr.mxu0 0.0
    %1206 = vmatpush1.msra.mxu0 0.0
    %1207 = vmatprep.subr.mxu0 0.0
    %1208 = vmatpush1.msra.mxu0 0.0
    %1209 = vmatprep.subr.mxu0 0.0
    %1210 = vmatpush1.msra.mxu0 0.0
    %1211 = vmatprep.subr.mxu0 0.0
    %1212 = vmatpush1.msra.mxu0 0.0
    %1213 = vmatprep.subr.mxu0 0.0
    %1214 = vmatpush1.msra.mxu0 0.0
    %1215 = vmatprep.subr.mxu0 0.0
    %1216 = vmatpush1.msra.mxu0 0.0
    %1217 = vmatprep.subr.mxu0 0.0
    %1218 = vmatpush1.msra.mxu0 0.0
    %1219 = vmatprep.subr.mxu0 0.0
    %1220 = vmatpush1.msra.mxu0 0.0
    %1221 = vmatprep.mubr.f32.mxu0 0.0
    %v1222 = vand.u32 %v1032, 4294901760
    %1223 = vmatmul.mubr.f32.gmra.mrb[0].mxu0 %v1222
    %v1224 = vpop.f32.mrb[0].mxu0
    %v1225 = vadd.f32 %v1114, %v1224
    %v1226 = vpop.f32.mrb[0].mxu0
    %1227 = vdwg.mxu0
    %1228 = vmatprep.subr.mxu0 0.0
    %v1229 = vand.u32 %v1015, 4294901760
    %v1230 = vsub.f32 %v1015, %v1229
    %1231 = vmatpush1.msra.mxu0 %v1230
    %1232 = vmatprep.subr.mxu0 0.0
    %v1233 = vand.u32 %v1016, 4294901760
    %v1234 = vsub.f32 %v1016, %v1233
    %1235 = vmatpush1.msra.mxu0 %v1234
    %1236 = vmatprep.subr.mxu0 0.0
    %v1237 = vand.u32 %v1017, 4294901760
    %v1238 = vsub.f32 %v1017, %v1237
    %1239 = vmatpush1.msra.mxu0 %v1238
    %1240 = vmatprep.subr.mxu0 0.0
    %v1241 = vand.u32 %v1018, 4294901760
    %v1242 = vsub.f32 %v1018, %v1241
    %1243 = vmatpush1.msra.mxu0 %v1242
    %1244 = vmatprep.subr.mxu0 0.0
    %v1245 = vand.u32 %v1019, 4294901760
    %v1246 = vsub.f32 %v1019, %v1245
    %1247 = vmatpush1.msra.mxu0 %v1246
    %1248 = vmatprep.subr.mxu0 0.0
    %v1249 = vand.u32 %v1020, 4294901760
    %v1250 = vsub.f32 %v1020, %v1249
    %1251 = vmatpush1.msra.mxu0 %v1250
    %1252 = vmatprep.subr.mxu0 0.0
    %v1253 = vand.u32 %v1021, 4294901760
    %v1254 = vsub.f32 %v1021, %v1253
    %1255 = vmatpush1.msra.mxu0 %v1254
    %1256 = vmatprep.subr.mxu0 0.0
    %v1257 = vand.u32 %v1022, 4294901760
    %v1258 = vsub.f32 %v1022, %v1257
    %1259 = vmatpush1.msra.mxu0 %v1258
    %1260 = vmatprep.subr.mxu0 0.0
    %1261 = vmatpush1.msra.mxu0 0.0
    %1262 = vmatprep.subr.mxu0 0.0
    %1263 = vmatpush1.msra.mxu0 0.0
    %1264 = vmatprep.subr.mxu0 0.0
    %1265 = vmatpush1.msra.mxu0 0.0
    %1266 = vmatprep.subr.mxu0 0.0
    %1267 = vmatpush1.msra.mxu0 0.0
    %1268 = vmatprep.subr.mxu0 0.0
    %1269 = vmatpush1.msra.mxu0 0.0
    %1270 = vmatprep.subr.mxu0 0.0
    %1271 = vmatpush1.msra.mxu0 0.0
    %1272 = vmatprep.subr.mxu0 0.0
    %1273 = vmatpush1.msra.mxu0 0.0
    %1274 = vmatprep.subr.mxu0 0.0
    %1275 = vmatpush1.msra.mxu0 0.0
    %1276 = vmatprep.subr.mxu0 0.0
    %1277 = vmatpush1.msra.mxu0 0.0
    %1278 = vmatprep.subr.mxu0 0.0
    %1279 = vmatpush1.msra.mxu0 0.0
    %1280 = vmatprep.subr.mxu0 0.0
    %1281 = vmatpush1.msra.mxu0 0.0
    %1282 = vmatprep.subr.mxu0 0.0
    %1283 = vmatpush1.msra.mxu0 0.0
    %1284 = vmatprep.subr.mxu0 0.0
    %1285 = vmatpush1.msra.mxu0 0.0
    %1286 = vmatprep.subr.mxu0 0.0
    %1287 = vmatpush1.msra.mxu0 0.0
    %1288 = vmatprep.subr.mxu0 0.0
    %1289 = vmatpush1.msra.mxu0 0.0
    %1290 = vmatprep.subr.mxu0 0.0
    %1291 = vmatpush1.msra.mxu0 0.0
    %1292 = vmatprep.subr.mxu0 0.0
    %1293 = vmatpush1.msra.mxu0 0.0
    %1294 = vmatprep.subr.mxu0 0.0
    %1295 = vmatpush1.msra.mxu0 0.0
    %1296 = vmatprep.subr.mxu0 0.0
    %1297 = vmatpush1.msra.mxu0 0.0
    %1298 = vmatprep.subr.mxu0 0.0
    %1299 = vmatpush1.msra.mxu0 0.0
    %1300 = vmatprep.subr.mxu0 0.0
    %1301 = vmatpush1.msra.mxu0 0.0
    %1302 = vmatprep.subr.mxu0 0.0
    %1303 = vmatpush1.msra.mxu0 0.0
    %1304 = vmatprep.subr.mxu0 0.0
    %1305 = vmatpush1.msra.mxu0 0.0
    %1306 = vmatprep.subr.mxu0 0.0
    %1307 = vmatpush1.msra.mxu0 0.0
    %1308 = vmatprep.mubr.f32.mxu0 0.0
    %v1309 = vand.u32 %v1032, 4294901760
    %v1310 = vsub.f32 %v1032, %v1309
    %1311 = vmatmul.mubr.f32.gmra.mrb[0].mxu0 %v1310
    %v1312 = vpop.f32.mrb[0].mxu0
    %v1313 = vadd.f32 %v1225, %v1312
    %v1314 = vpop.f32.mrb[0].mxu0
    %1315 = vdwg.mxu0
    %1316 = vmatprep.subr.mxu0 0.0
    %v1317 = vand.u32 %v1015, 4294901760
    %1318 = vmatpush1.msra.mxu0 %v1317
    %1319 = vmatprep.subr.mxu0 0.0
    %v1320 = vand.u32 %v1016, 4294901760
    %1321 = vmatpush1.msra.mxu0 %v1320
    %1322 = vmatprep.subr.mxu0 0.0
    %v1323 = vand.u32 %v1017, 4294901760
    %1324 = vmatpush1.msra.mxu0 %v1323
    %1325 = vmatprep.subr.mxu0 0.0
    %v1326 = vand.u32 %v1018, 4294901760
    %1327 = vmatpush1.msra.mxu0 %v1326
    %1328 = vmatprep.subr.mxu0 0.0
    %v1329 = vand.u32 %v1019, 4294901760
    %1330 = vmatpush1.msra.mxu0 %v1329
    %1331 = vmatprep.subr.mxu0 0.0
    %v1332 = vand.u32 %v1020, 4294901760
    %1333 = vmatpush1.msra.mxu0 %v1332
    %1334 = vmatprep.subr.mxu0 0.0
    %v1335 = vand.u32 %v1021, 4294901760
    %1336 = vmatpush1.msra.mxu0 %v1335
    %1337 = vmatprep.subr.mxu0 0.0
    %v1338 = vand.u32 %v1022, 4294901760
    %1339 = vmatpush1.msra.mxu0 %v1338
    %1340 = vmatprep.subr.mxu0 0.0
    %1341 = vmatpush1.msra.mxu0 0.0
    %1342 = vmatprep.subr.mxu0 0.0
    %1343 = vmatpush1.msra.mxu0 0.0
    %1344 = vmatprep.subr.mxu0 0.0
    %1345 = vmatpush1.msra.mxu0 0.0
    %1346 = vmatprep.subr.mxu0 0.0
    %1347 = vmatpush1.msra.mxu0 0.0
    %1348 = vmatprep.subr.mxu0 0.0
    %1349 = vmatpush1.msra.mxu0 0.0
    %1350 = vmatprep.subr.mxu0 0.0
    %1351 = vmatpush1.msra.mxu0 0.0
    %1352 = vmatprep.subr.mxu0 0.0
    %1353 = vmatpush1.msra.mxu0 0.0
    %1354 = vmatprep.subr.mxu0 0.0
    %1355 = vmatpush1.msra.mxu0 0.0
    %1356 = vmatprep.subr.mxu0 0.0
    %1357 = vmatpush1.msra.mxu0 0.0
    %1358 = vmatprep.subr.mxu0 0.0
    %1359 = vmatpush1.msra.mxu0 0.0
    %1360 = vmatprep.subr.mxu0 0.0
    %1361 = vmatpush1.msra.mxu0 0.0
    %1362 = vmatprep.subr.mxu0 0.0
    %1363 = vmatpush1.msra.mxu0 0.0
    %1364 = vmatprep.subr.mxu0 0.0
    %1365 = vmatpush1.msra.mxu0 0.0
    %1366 = vmatprep.subr.mxu0 0.0
    %1367 = vmatpush1.msra.mxu0 0.0
    %1368 = vmatprep.subr.mxu0 0.0
    %1369 = vmatpush1.msra.mxu0 0.0
    %1370 = vmatprep.subr.mxu0 0.0
    %1371 = vmatpush1.msra.mxu0 0.0
    %1372 = vmatprep.subr.mxu0 0.0
    %1373 = vmatpush1.msra.mxu0 0.0
    %1374 = vmatprep.subr.mxu0 0.0
    %1375 = vmatpush1.msra.mxu0 0.0
    %1376 = vmatprep.subr.mxu0 0.0
    %1377 = vmatpush1.msra.mxu0 0.0
    %1378 = vmatprep.subr.mxu0 0.0
    %1379 = vmatpush1.msra.mxu0 0.0
    %1380 = vmatprep.subr.mxu0 0.0
    %1381 = vmatpush1.msra.mxu0 0.0
    %1382 = vmatprep.subr.mxu0 0.0
    %1383 = vmatpush1.msra.mxu0 0.0
    %1384 = vmatprep.subr.mxu0 0.0
    %1385 = vmatpush1.msra.mxu0 0.0
    %1386 = vmatprep.subr.mxu0 0.0
    %1387 = vmatpush1.msra.mxu0 0.0
    %1388 = vmatprep.mubr.f32.mxu0 0.0
    %v1389 = vand.u32 %v1032, 4294901760
    %v1390 = vsub.f32 %v1032, %v1389
    %v1391 = vand.u32 %v1390, 4294901760
    %1392 = vmatmul.mubr.f32.gmra.mrb[0].mxu0 %v1391
    %v1393 = vpop.f32.mrb[0].mxu0
    %v1394 = vadd.f32 %v1313, %v1393
    %v1395 = vpop.f32.mrb[0].mxu0
    %1396 = vdwg.mxu0
    %1397 = vmatprep.subr.mxu0 0.0
    %v1398 = vand.u32 %v1015, 4294901760
    %v1399 = vsub.f32 %v1015, %v1398
    %v1400 = vand.u32 %v1399, 4294901760
    %1401 = vmatpush1.msra.mxu0 %v1400
    %1402 = vmatprep.subr.mxu0 0.0
    %v1403 = vand.u32 %v1016, 4294901760
    %v1404 = vsub.f32 %v1016, %v1403
    %v1405 = vand.u32 %v1404, 4294901760
    %1406 = vmatpush1.msra.mxu0 %v1405
    %1407 = vmatprep.subr.mxu0 0.0
    %v1408 = vand.u32 %v1017, 4294901760
    %v1409 = vsub.f32 %v1017, %v1408
    %v1410 = vand.u32 %v1409, 4294901760
    %1411 = vmatpush1.msra.mxu0 %v1410
    %1412 = vmatprep.subr.mxu0 0.0
    %v1413 = vand.u32 %v1018, 4294901760
    %v1414 = vsub.f32 %v1018, %v1413
    %v1415 = vand.u32 %v1414, 4294901760
    %1416 = vmatpush1.msra.mxu0 %v1415
    %1417 = vmatprep.subr.mxu0 0.0
    %v1418 = vand.u32 %v1019, 4294901760
    %v1419 = vsub.f32 %v1019, %v1418
    %v1420 = vand.u32 %v1419, 4294901760
    %1421 = vmatpush1.msra.mxu0 %v1420
    %1422 = vmatprep.subr.mxu0 0.0
    %v1423 = vand.u32 %v1020, 4294901760
    %v1424 = vsub.f32 %v1020, %v1423
    %v1425 = vand.u32 %v1424, 4294901760
    %1426 = vmatpush1.msra.mxu0 %v1425
    %1427 = vmatprep.subr.mxu0 0.0
    %v1428 = vand.u32 %v1021, 4294901760
    %v1429 = vsub.f32 %v1021, %v1428
    %v1430 = vand.u32 %v1429, 4294901760
    %1431 = vmatpush1.msra.mxu0 %v1430
    %1432 = vmatprep.subr.mxu0 0.0
    %v1433 = vand.u32 %v1022, 4294901760
    %v1434 = vsub.f32 %v1022, %v1433
    %v1435 = vand.u32 %v1434, 4294901760
    %1436 = vmatpush1.msra.mxu0 %v1435
    %1437 = vmatprep.subr.mxu0 0.0
    %1438 = vmatpush1.msra.mxu0 0.0
    %1439 = vmatprep.subr.mxu0 0.0
    %1440 = vmatpush1.msra.mxu0 0.0
    %1441 = vmatprep.subr.mxu0 0.0
    %1442 = vmatpush1.msra.mxu0 0.0
    %1443 = vmatprep.subr.mxu0 0.0
    %1444 = vmatpush1.msra.mxu0 0.0
    %1445 = vmatprep.subr.mxu0 0.0
    %1446 = vmatpush1.msra.mxu0 0.0
    %1447 = vmatprep.subr.mxu0 0.0
    %1448 = vmatpush1.msra.mxu0 0.0
    %1449 = vmatprep.subr.mxu0 0.0
    %1450 = vmatpush1.msra.mxu0 0.0
    %1451 = vmatprep.subr.mxu0 0.0
    %1452 = vmatpush1.msra.mxu0 0.0
    %1453 = vmatprep.subr.mxu0 0.0
    %1454 = vmatpush1.msra.mxu0 0.0
    %1455 = vmatprep.subr.mxu0 0.0
    %1456 = vmatpush1.msra.mxu0 0.0
    %1457 = vmatprep.subr.mxu0 0.0
    %1458 = vmatpush1.msra.mxu0 0.0
    %1459 = vmatprep.subr.mxu0 0.0
    %1460 = vmatpush1.msra.mxu0 0.0
    %1461 = vmatprep.subr.mxu0 0.0
    %1462 = vmatpush1.msra.mxu0 0.0
    %1463 = vmatprep.subr.mxu0 0.0
    %1464 = vmatpush1.msra.mxu0 0.0
    %1465 = vmatprep.subr.mxu0 0.0
    %1466 = vmatpush1.msra.mxu0 0.0
    %1467 = vmatprep.subr.mxu0 0.0
    %1468 = vmatpush1.msra.mxu0 0.0
    %1469 = vmatprep.subr.mxu0 0.0
    %1470 = vmatpush1.msra.mxu0 0.0
    %1471 = vmatprep.subr.mxu0 0.0
    %1472 = vmatpush1.msra.mxu0 0.0
    %1473 = vmatprep.subr.mxu0 0.0
    %1474 = vmatpush1.msra.mxu0 0.0
    %1475 = vmatprep.subr.mxu0 0.0
    %1476 = vmatpush1.msra.mxu0 0.0
    %1477 = vmatprep.subr.mxu0 0.0
    %1478 = vmatpush1.msra.mxu0 0.0
    %1479 = vmatprep.subr.mxu0 0.0
    %1480 = vmatpush1.msra.mxu0 0.0
    %1481 = vmatprep.subr.mxu0 0.0
    %1482 = vmatpush1.msra.mxu0 0.0
    %1483 = vmatprep.subr.mxu0 0.0
    %1484 = vmatpush1.msra.mxu0 0.0
    %1485 = vmatprep.mubr.f32.mxu0 0.0
    %v1486 = vand.u32 %v1032, 4294901760
    %1487 = vmatmul.mubr.f32.gmra.mrb[0].mxu0 %v1486
    %v1488 = vpop.f32.mrb[0].mxu0
    %v1489 = vadd.f32 %v1394, %v1488
    %v1490 = vpop.f32.mrb[0].mxu0
    %1491 = vdwg.mxu0
    %1492 = vmatprep.subr.mxu0 0.0
    %v1493 = vand.u32 %v1015, 4294901760
    %1494 = vmatpush1.msra.mxu0 %v1493
    %1495 = vmatprep.subr.mxu0 0.0
    %v1496 = vand.u32 %v1016, 4294901760
    %1497 = vmatpush1.msra.mxu0 %v1496
    %1498 = vmatprep.subr.mxu0 0.0
    %v1499 = vand.u32 %v1017, 4294901760
    %1500 = vmatpush1.msra.mxu0 %v1499
    %1501 = vmatprep.subr.mxu0 0.0
    %v1502 = vand.u32 %v1018, 4294901760
    %1503 = vmatpush1.msra.mxu0 %v1502
    %1504 = vmatprep.subr.mxu0 0.0
    %v1505 = vand.u32 %v1019, 4294901760
    %1506 = vmatpush1.msra.mxu0 %v1505
    %1507 = vmatprep.subr.mxu0 0.0
    %v1508 = vand.u32 %v1020, 4294901760
    %1509 = vmatpush1.msra.mxu0 %v1508
    %1510 = vmatprep.subr.mxu0 0.0
    %v1511 = vand.u32 %v1021, 4294901760
    %1512 = vmatpush1.msra.mxu0 %v1511
    %1513 = vmatprep.subr.mxu0 0.0
    %v1514 = vand.u32 %v1022, 4294901760
    %1515 = vmatpush1.msra.mxu0 %v1514
    %1516 = vmatprep.subr.mxu0 0.0
    %1517 = vmatpush1.msra.mxu0 0.0
    %1518 = vmatprep.subr.mxu0 0.0
    %1519 = vmatpush1.msra.mxu0 0.0
    %1520 = vmatprep.subr.mxu0 0.0
    %1521 = vmatpush1.msra.mxu0 0.0
    %1522 = vmatprep.subr.mxu0 0.0
    %1523 = vmatpush1.msra.mxu0 0.0
    %1524 = vmatprep.subr.mxu0 0.0
    %1525 = vmatpush1.msra.mxu0 0.0
    %1526 = vmatprep.subr.mxu0 0.0
    %1527 = vmatpush1.msra.mxu0 0.0
    %1528 = vmatprep.subr.mxu0 0.0
    %1529 = vmatpush1.msra.mxu0 0.0
    %1530 = vmatprep.subr.mxu0 0.0
    %1531 = vmatpush1.msra.mxu0 0.0
    %1532 = vmatprep.subr.mxu0 0.0
    %1533 = vmatpush1.msra.mxu0 0.0
    %1534 = vmatprep.subr.mxu0 0.0
    %1535 = vmatpush1.msra.mxu0 0.0
    %1536 = vmatprep.subr.mxu0 0.0
    %1537 = vmatpush1.msra.mxu0 0.0
    %1538 = vmatprep.subr.mxu0 0.0
    %1539 = vmatpush1.msra.mxu0 0.0
    %1540 = vmatprep.subr.mxu0 0.0
    %1541 = vmatpush1.msra.mxu0 0.0
    %1542 = vmatprep.subr.mxu0 0.0
    %1543 = vmatpush1.msra.mxu0 0.0
    %1544 = vmatprep.subr.mxu0 0.0
    %1545 = vmatpush1.msra.mxu0 0.0
    %1546 = vmatprep.subr.mxu0 0.0
    %1547 = vmatpush1.msra.mxu0 0.0
    %1548 = vmatprep.subr.mxu0 0.0
    %1549 = vmatpush1.msra.mxu0 0.0
    %1550 = vmatprep.subr.mxu0 0.0
    %1551 = vmatpush1.msra.mxu0 0.0
    %1552 = vmatprep.subr.mxu0 0.0
    %1553 = vmatpush1.msra.mxu0 0.0
    %1554 = vmatprep.subr.mxu0 0.0
    %1555 = vmatpush1.msra.mxu0 0.0
    %1556 = vmatprep.subr.mxu0 0.0
    %1557 = vmatpush1.msra.mxu0 0.0
    %1558 = vmatprep.subr.mxu0 0.0
    %1559 = vmatpush1.msra.mxu0 0.0
    %1560 = vmatprep.subr.mxu0 0.0
    %1561 = vmatpush1.msra.mxu0 0.0
    %1562 = vmatprep.subr.mxu0 0.0
    %1563 = vmatpush1.msra.mxu0 0.0
    %1564 = vmatprep.mubr.f32.mxu0 0.0
    %v1565 = vand.u32 %v1032, 4294901760
    %1566 = vmatmul.mubr.f32.gmra.mrb[0].mxu0 %v1565
    %v1567 = vpop.f32.mrb[0].mxu0
    %v1568 = vadd.f32 %v1489, %v1567
    %v1569 = vpop.f32.mrb[0].mxu0
    %1570 = vdwg.mxu0
    %1571 = vst [vmem:[%s7] sm:$0xf] %v1568
    // Predicated region
    $region38: #{chunked_hypernet_forward.1} parent=1 // pred_check
      _
    $region39: #{chunked_hypernet_forward.1} parent=1 // pred_check_branch
      %1573 = sbr.rel (0) target = $region41
    $region40: #{chunked_hypernet_forward.1} parent=1 // pred_region
      _
    $region41: #{chunked_hypernet_forward.1} parent=1 // pred_fallthru
      _
    // Predicated region
    $region42: #{chunked_hypernet_forward.1} parent=1 // pred_check
      _
    $region43: #{chunked_hypernet_forward.1} parent=1 // pred_check_branch
      %1575 = sbr.rel (0) target = $region45
    $region44: #{chunked_hypernet_forward.1} parent=1 // pred_region
      _
    $region45: #{chunked_hypernet_forward.1} parent=1 // pred_fallthru
      _
    %1576 = vsyncpa [#allocation3], 1
    %1577 = vsyncpa [#allocation5], 1

</llo_original>
